<compile_context>
chip_gen: v6e
topology: v6e:2x2x1
jax: 0.10.0
libtpu: 0.0.40
codegen_flags: <defaults>
</compile_context>

<pallas_src>
import jax
import jax.numpy as jnp
from jax.experimental import pallas as pl
from jax.experimental.pallas import tpu as pltpu

LANE = 128  # pad every feature dim to the TPU lane width


def _fused_sage3_kernel(a1_ref, a2_ref, a3_ref, x_ref,
                        w1_ref, b1_ref, w2_ref, b2_ref, w3_ref, b3_ref,
                        o_ref):
    """Fused 3-layer SAGEConv('mean') forward (eval mode).

    a*_ref : (N, N)         bf16 row-normalized adjacency per layer
    x_ref  : (N, LANE)      bf16 input features (zero-padded)
    w*_ref : (2*LANE, LANE) bf16 stacked [W_self; W_neigh] (zero-padded)
    b*_ref : (1, LANE)      f32 bias (zero-padded)
    o_ref  : (N, LANE)      f32 output (lane-dense)
    """

    def layer(a_ref, w_ref, b_ref, h_bf16, relu):
        # mean aggregation over in-neighbors: one MXU matmul, f32 accumulation
        neigh = jnp.dot(a_ref[...], h_bf16, preferred_element_type=jnp.float32)
        # fused self + neighbor projection: [h | A@h] @ [W_self; W_neigh]
        cat = jnp.concatenate([h_bf16, neigh.astype(jnp.bfloat16)], axis=-1)
        out = jnp.dot(cat, w_ref[...], preferred_element_type=jnp.float32)
        out = out + b_ref[...]
        if relu:
            out = jnp.maximum(out, 0.0)   # f32 VPU
        return out

    h0 = x_ref[...]                                             # (N, LANE) bf16
    h1 = layer(a1_ref, w1_ref, b1_ref, h0, relu=True)
    h2 = layer(a2_ref, w2_ref, b2_ref, h1.astype(jnp.bfloat16), relu=True)
    h3 = layer(a3_ref, w3_ref, b3_ref, h2.astype(jnp.bfloat16), relu=False)
    o_ref[...] = h3


def _pad_cols(m, width):
    r, c = m.shape
    assert c <= width
    return jnp.zeros((r, width), m.dtype).at[:, :c].set(m)


def _pack_layer(w_self, w_neigh, b, width):
    """Stack + zero-pad a layer's weights into one (2*width, width) bf16 matrix."""
    din, dout = w_self.shape
    w = jnp.zeros((2 * width, width), jnp.float32)
    w = w.at[:din, :dout].set(w_self)
    w = w.at[width:width + din, :dout].set(w_neigh)
    bp = jnp.zeros((1, width), jnp.float32).at[0, :dout].set(b)
    return w.astype(jnp.bfloat16), bp


def sage_forward(a_norms, x, params):
    """SAGE.forward (eval mode): 3 SAGEConv('mean') layers with ReLU between.

    a_norms: list of 3 dense (N, N) row-normalized adjacencies (src == dst node
             set, full-neighbor style block per layer).
    x      : (N, in_size) f32 node features.
    params : list of 3 (w_self, w_neigh, bias) tuples.
    """
    n = x.shape[0]
    assert n % 8 == 0, "node count must be a multiple of 8 (sublane width)"
    out_size = params[-1][0].shape[1]

    x_p = _pad_cols(x, LANE).astype(jnp.bfloat16)
    a_p = [a.astype(jnp.bfloat16) for a in a_norms]
    (w1, b1), (w2, b2), (w3, b3) = [_pack_layer(*p, LANE) for p in params]

    def full(shape):
        return pl.BlockSpec(shape, lambda i: (0,) * len(shape))

    out = pl.pallas_call(
        _fused_sage3_kernel,
        out_shape=jax.ShapeDtypeStruct((n, LANE), jnp.float32),
        grid_spec=pltpu.PrefetchScalarGridSpec(
            num_scalar_prefetch=0,
            grid=(1,),  # whole problem is VMEM-resident -> single step, no pipeline overhead
            in_specs=[
                full((n, n)), full((n, n)), full((n, n)),      # A1..A3
                full((n, LANE)),                               # X
                full((2 * LANE, LANE)), full((1, LANE)),       # W1, b1
                full((2 * LANE, LANE)), full((1, LANE)),       # W2, b2
                full((2 * LANE, LANE)), full((1, LANE)),       # W3, b3
            ],
            out_specs=full((n, LANE)),
        ),
        compiler_params=pltpu.CompilerParams(
            dimension_semantics=("arbitrary",),
            vmem_limit_bytes=32 * 1024 * 1024,   # fits v7x's smaller VMEM budget
        ),
    )(a_p[0], a_p[1], a_p[2], x_p, w1, b1, w2, b2, w3, b3)

    return out[:, :out_size]


def _sage_reference_f32(a_norms, x, params):
    """Plain f32 JAX reference (exact module semantics, eval mode)."""
    h = x
    for l, (w_self, w_neigh, b) in enumerate(params):
        neigh = a_norms[l] @ h
        h = h @ w_self + neigh @ w_neigh + b
        if l != len(params) - 1:
            h = jnp.maximum(h, 0.0)
    return h


def _sage_reference_bf16(a_norms, x, params):
    """Reference mirroring the kernel numerics (bf16 MXU inputs, f32 accumulate)."""
    h = _pad_cols(x, LANE).astype(jnp.bfloat16)
    out = None
    for l, (w_self, w_neigh, b) in enumerate(params):
        w, bp = _pack_layer(w_self, w_neigh, b, LANE)
        a = a_norms[l].astype(jnp.bfloat16)
        neigh = jnp.dot(a, h, preferred_element_type=jnp.float32)
        cat = jnp.concatenate([h, neigh.astype(jnp.bfloat16)], axis=-1)
        o = jnp.dot(cat, w, preferred_element_type=jnp.float32) + bp
        if l != len(params) - 1:
            h = jnp.maximum(o, 0.0).astype(jnp.bfloat16)
        else:
            out = o
    return out[:, :params[-1][0].shape[1]]


if __name__ == "__main__":
    # Small, deterministic synthetic graph + features.
    N = 128          # nodes (same src/dst set for every block, full-neighbor style)
    IN_SIZE = 32
    HID_SIZE = 32
    OUT_SIZE = 16

    key = jax.random.PRNGKey(0)

    # Random directed graph -> dense row-normalized adjacency (mean aggregation).
    key, ka = jax.random.split(key)
    adj = (jax.random.uniform(ka, (N, N)) < 0.2).astype(jnp.float32)
    deg = jnp.maximum(adj.sum(axis=1, keepdims=True), 1.0)
    a_norm = adj / deg
    a_norms = [a_norm, a_norm, a_norm]   # one "block" per layer

    key, kx = jax.random.split(key)
    x = jax.random.normal(kx, (N, IN_SIZE), jnp.float32)

    params = []
    for (din, dout) in [(IN_SIZE, HID_SIZE), (HID_SIZE, HID_SIZE), (HID_SIZE, OUT_SIZE)]:
        key, k1, k2 = jax.random.split(key, 3)
        params.append((jax.random.normal(k1, (din, dout), jnp.float32) * 0.1,
                       jax.random.normal(k2, (din, dout), jnp.float32) * 0.1,
                       jnp.zeros((dout,), jnp.float32)))

    out = jax.block_until_ready(sage_forward(a_norms, x, params))
    assert out.shape == (N, OUT_SIZE)

    # Tight check against a reference that mirrors the kernel's bf16/f32 numerics.
    ref_bf16 = _sage_reference_bf16(a_norms, x, params)
    assert jnp.allclose(out, ref_bf16, atol=1e-2, rtol=1e-2), "mismatch vs bf16 reference"

    # Looser semantic check against the pure-f32 module reference.
    ref_f32 = _sage_reference_f32(a_norms, x, params)
    assert jnp.allclose(out, ref_f32, atol=5e-2, rtol=5e-2), "mismatch vs f32 reference"

    print("KERNEL_OK")
</pallas_src>

<mosaic_0001>
module attributes {stable_mosaic.version = 11 : i64} {
  func.func @_fused_sage3_kernel(%arg0: i32, %arg1: memref<128x128xbf16, #tpu.memory_space<vmem>>, %arg2: memref<128x128xbf16, #tpu.memory_space<vmem>>, %arg3: memref<128x128xbf16, #tpu.memory_space<vmem>>, %arg4: memref<128x128xbf16, #tpu.memory_space<vmem>>, %arg5: memref<256x128xbf16, #tpu.memory_space<vmem>>, %arg6: memref<1x128xf32, #tpu.memory_space<vmem>>, %arg7: memref<256x128xbf16, #tpu.memory_space<vmem>>, %arg8: memref<1x128xf32, #tpu.memory_space<vmem>>, %arg9: memref<256x128xbf16, #tpu.memory_space<vmem>>, %arg10: memref<1x128xf32, #tpu.memory_space<vmem>>, %arg11: memref<128x128xf32, #tpu.memory_space<vmem>>) attributes {dimension_semantics = [#tpu.dimension_semantics<arbitrary>], iteration_bounds = array<i64: 1>, scalar_prefetch = 0 : i64, scratch_operands = 0 : i64, tpu.core_type = #tpu.core_type<tc>, window_params = [{pipeline_mode = #tpu.pipeline_mode<synchronous>, transform_indices = @transform_0, window_bounds = array<i64: 128, 128>}, {pipeline_mode = #tpu.pipeline_mode<synchronous>, transform_indices = @transform_1, window_bounds = array<i64: 128, 128>}, {pipeline_mode = #tpu.pipeline_mode<synchronous>, transform_indices = @transform_2, window_bounds = array<i64: 128, 128>}, {pipeline_mode = #tpu.pipeline_mode<synchronous>, transform_indices = @transform_3, window_bounds = array<i64: 128, 128>}, {pipeline_mode = #tpu.pipeline_mode<synchronous>, transform_indices = @transform_4, window_bounds = array<i64: 256, 128>}, {pipeline_mode = #tpu.pipeline_mode<synchronous>, transform_indices = @transform_5, window_bounds = array<i64: 1, 128>}, {pipeline_mode = #tpu.pipeline_mode<synchronous>, transform_indices = @transform_6, window_bounds = array<i64: 256, 128>}, {pipeline_mode = #tpu.pipeline_mode<synchronous>, transform_indices = @transform_7, window_bounds = array<i64: 1, 128>}, {pipeline_mode = #tpu.pipeline_mode<synchronous>, transform_indices = @transform_8, window_bounds = array<i64: 256, 128>}, {pipeline_mode = #tpu.pipeline_mode<synchronous>, transform_indices = @transform_9, window_bounds = array<i64: 1, 128>}, {pipeline_mode = #tpu.pipeline_mode<synchronous>, transform_indices = @transform_10, window_bounds = array<i64: 128, 128>}]} {
    %c0 = arith.constant 0 : index
    %c0_0 = arith.constant 0 : index
    %0 = vector.load %arg4[%c0, %c0_0] : memref<128x128xbf16, #tpu.memory_space<vmem>>, vector<128x128xbf16>
    %c0_1 = arith.constant 0 : index
    %c0_2 = arith.constant 0 : index
    %1 = vector.load %arg1[%c0_1, %c0_2] : memref<128x128xbf16, #tpu.memory_space<vmem>>, vector<128x128xbf16>
    %cst = arith.constant dense<0.000000e+00> : vector<128x128xf32>
    %2 = tpu.matmul %1, %0, %cst {dimension_numbers = #tpu.dot_dimension_numbers<[1], [0], [0], [1], [0, 0, 1, 1], [], []>} : vector<128x128xbf16>, vector<128x128xbf16>, vector<128x128xf32> -> vector<128x128xf32>
    %3 = arith.truncf %2 : vector<128x128xf32> to vector<128x128xbf16>
    %4 = tpu.concatenate %0, %3 in 1 : vector<128x128xbf16>, vector<128x128xbf16> -> vector<128x256xbf16>
    %c0_3 = arith.constant 0 : index
    %c0_4 = arith.constant 0 : index
    %5 = vector.load %arg5[%c0_3, %c0_4] : memref<256x128xbf16, #tpu.memory_space<vmem>>, vector<256x128xbf16>
    %cst_5 = arith.constant dense<0.000000e+00> : vector<128x128xf32>
    %6 = tpu.matmul %4, %5, %cst_5 {dimension_numbers = #tpu.dot_dimension_numbers<[1], [0], [0], [1], [0, 0, 1, 1], [], []>} : vector<128x256xbf16>, vector<256x128xbf16>, vector<128x128xf32> -> vector<128x128xf32>
    %c0_6 = arith.constant 0 : index
    %c0_7 = arith.constant 0 : index
    %7 = vector.load %arg6[%c0_6, %c0_7] : memref<1x128xf32, #tpu.memory_space<vmem>>, vector<1x128xf32>
    %8 = vector.broadcast %7 : vector<1x128xf32> to vector<128x128xf32>
    %9 = arith.addf %6, %8 : vector<128x128xf32>
    %cst_8 = arith.constant 0.000000e+00 : f32
    %10 = vector.broadcast %cst_8 : f32 to vector<128x128xf32>
    %11 = arith.maximumf %9, %10 : vector<128x128xf32>
    %12 = arith.truncf %11 : vector<128x128xf32> to vector<128x128xbf16>
    %c0_9 = arith.constant 0 : index
    %c0_10 = arith.constant 0 : index
    %13 = vector.load %arg2[%c0_9, %c0_10] : memref<128x128xbf16, #tpu.memory_space<vmem>>, vector<128x128xbf16>
    %cst_11 = arith.constant dense<0.000000e+00> : vector<128x128xf32>
    %14 = tpu.matmul %13, %12, %cst_11 {dimension_numbers = #tpu.dot_dimension_numbers<[1], [0], [0], [1], [0, 0, 1, 1], [], []>} : vector<128x128xbf16>, vector<128x128xbf16>, vector<128x128xf32> -> vector<128x128xf32>
    %15 = arith.truncf %14 : vector<128x128xf32> to vector<128x128xbf16>
    %16 = tpu.concatenate %12, %15 in 1 : vector<128x128xbf16>, vector<128x128xbf16> -> vector<128x256xbf16>
    %c0_12 = arith.constant 0 : index
    %c0_13 = arith.constant 0 : index
    %17 = vector.load %arg7[%c0_12, %c0_13] : memref<256x128xbf16, #tpu.memory_space<vmem>>, vector<256x128xbf16>
    %cst_14 = arith.constant dense<0.000000e+00> : vector<128x128xf32>
    %18 = tpu.matmul %16, %17, %cst_14 {dimension_numbers = #tpu.dot_dimension_numbers<[1], [0], [0], [1], [0, 0, 1, 1], [], []>} : vector<128x256xbf16>, vector<256x128xbf16>, vector<128x128xf32> -> vector<128x128xf32>
    %c0_15 = arith.constant 0 : index
    %c0_16 = arith.constant 0 : index
    %19 = vector.load %arg8[%c0_15, %c0_16] : memref<1x128xf32, #tpu.memory_space<vmem>>, vector<1x128xf32>
    %20 = vector.broadcast %19 : vector<1x128xf32> to vector<128x128xf32>
    %21 = arith.addf %18, %20 : vector<128x128xf32>
    %cst_17 = arith.constant 0.000000e+00 : f32
    %22 = vector.broadcast %cst_17 : f32 to vector<128x128xf32>
    %23 = arith.maximumf %21, %22 : vector<128x128xf32>
    %24 = arith.truncf %23 : vector<128x128xf32> to vector<128x128xbf16>
    %c0_18 = arith.constant 0 : index
    %c0_19 = arith.constant 0 : index
    %25 = vector.load %arg3[%c0_18, %c0_19] : memref<128x128xbf16, #tpu.memory_space<vmem>>, vector<128x128xbf16>
    %cst_20 = arith.constant dense<0.000000e+00> : vector<128x128xf32>
    %26 = tpu.matmul %25, %24, %cst_20 {dimension_numbers = #tpu.dot_dimension_numbers<[1], [0], [0], [1], [0, 0, 1, 1], [], []>} : vector<128x128xbf16>, vector<128x128xbf16>, vector<128x128xf32> -> vector<128x128xf32>
    %27 = arith.truncf %26 : vector<128x128xf32> to vector<128x128xbf16>
    %28 = tpu.concatenate %24, %27 in 1 : vector<128x128xbf16>, vector<128x128xbf16> -> vector<128x256xbf16>
    %c0_21 = arith.constant 0 : index
    %c0_22 = arith.constant 0 : index
    %29 = vector.load %arg9[%c0_21, %c0_22] : memref<256x128xbf16, #tpu.memory_space<vmem>>, vector<256x128xbf16>
    %cst_23 = arith.constant dense<0.000000e+00> : vector<128x128xf32>
    %30 = tpu.matmul %28, %29, %cst_23 {dimension_numbers = #tpu.dot_dimension_numbers<[1], [0], [0], [1], [0, 0, 1, 1], [], []>} : vector<128x256xbf16>, vector<256x128xbf16>, vector<128x128xf32> -> vector<128x128xf32>
    %c0_24 = arith.constant 0 : index
    %c0_25 = arith.constant 0 : index
    %31 = vector.load %arg10[%c0_24, %c0_25] : memref<1x128xf32, #tpu.memory_space<vmem>>, vector<1x128xf32>
    %32 = vector.broadcast %31 : vector<1x128xf32> to vector<128x128xf32>
    %33 = arith.addf %30, %32 : vector<128x128xf32>
    %c0_26 = arith.constant 0 : index
    %c0_27 = arith.constant 0 : index
    %34 = vector.load %arg11[%c0_26, %c0_27] : memref<128x128xf32, #tpu.memory_space<vmem>>, vector<128x128xf32>
    tpu.vector_store %arg11[%c0_26, %c0_27], %33 {strides = array<i32>} : memref<128x128xf32, #tpu.memory_space<vmem>>, vector<128x128xf32>,
    return
  }
  func.func @transform_0(%arg0: i32) -> (i32, i32) {
    %c0_i32 = arith.constant 0 : i32
    %c0_i32_0 = arith.constant 0 : i32
    %c0_i32_1 = arith.constant 0 : i32
    return %c0_i32, %c0_i32_0 : i32, i32
  }
  func.func @transform_1(%arg0: i32) -> (i32, i32) {
    %c0_i32 = arith.constant 0 : i32
    %c0_i32_0 = arith.constant 0 : i32
    %c0_i32_1 = arith.constant 0 : i32
    return %c0_i32, %c0_i32_0 : i32, i32
  }
  func.func @transform_2(%arg0: i32) -> (i32, i32) {
    %c0_i32 = arith.constant 0 : i32
    %c0_i32_0 = arith.constant 0 : i32
    %c0_i32_1 = arith.constant 0 : i32
    return %c0_i32, %c0_i32_0 : i32, i32
  }
  func.func @transform_3(%arg0: i32) -> (i32, i32) {
    %c0_i32 = arith.constant 0 : i32
    %c0_i32_0 = arith.constant 0 : i32
    %c0_i32_1 = arith.constant 0 : i32
    return %c0_i32, %c0_i32_0 : i32, i32
  }
  func.func @transform_4(%arg0: i32) -> (i32, i32) {
    %c0_i32 = arith.constant 0 : i32
    %c0_i32_0 = arith.constant 0 : i32
    %c0_i32_1 = arith.constant 0 : i32
    return %c0_i32, %c0_i32_0 : i32, i32
  }
  func.func @transform_5(%arg0: i32) -> (i32, i32) {
    %c0_i32 = arith.constant 0 : i32
    %c0_i32_0 = arith.constant 0 : i32
    %c0_i32_1 = arith.constant 0 : i32
    return %c0_i32, %c0_i32_0 : i32, i32
  }
  func.func @transform_6(%arg0: i32) -> (i32, i32) {
    %c0_i32 = arith.constant 0 : i32
    %c0_i32_0 = arith.constant 0 : i32
    %c0_i32_1 = arith.constant 0 : i32
    return %c0_i32, %c0_i32_0 : i32, i32
  }
  func.func @transform_7(%arg0: i32) -> (i32, i32) {
    %c0_i32 = arith.constant 0 : i32
    %c0_i32_0 = arith.constant 0 : i32
    %c0_i32_1 = arith.constant 0 : i32
    return %c0_i32, %c0_i32_0 : i32, i32
  }
  func.func @transform_8(%arg0: i32) -> (i32, i32) {
    %c0_i32 = arith.constant 0 : i32
    %c0_i32_0 = arith.constant 0 : i32
    %c0_i32_1 = arith.constant 0 : i32
    return %c0_i32, %c0_i32_0 : i32, i32
  }
  func.func @transform_9(%arg0: i32) -> (i32, i32) {
    %c0_i32 = arith.constant 0 : i32
    %c0_i32_0 = arith.constant 0 : i32
    %c0_i32_1 = arith.constant 0 : i32
    return %c0_i32, %c0_i32_0 : i32, i32
  }
  func.func @transform_10(%arg0: i32) -> (i32, i32) {
    %c0_i32 = arith.constant 0 : i32
    %c0_i32_0 = arith.constant 0 : i32
    %c0_i32_1 = arith.constant 0 : i32
    return %c0_i32, %c0_i32_0 : i32, i32
  }
}

</mosaic_0001>

<llo_original>
// kernel: tpu_custom_call.1
$region0: #{tpu_custom_call.1}
  #allocation0 [shape = 'u32[]', space=smem, size = 0x4, offset = 0x4, fixed_abs, tag = 'smem constant byte address 0x4 - core index']
  #allocation1 [shape = 'u32[144,128]{1,0:T(1,128)}', space=vmem, size = 0x12000, scoped, tag = 'internal scratch']
  %s0 = inlined_call_operand.hbm [shape: bf16[128,128], index: 0, kind: input, shape index: {}]
  %s1 = inlined_call_operand.hbm [shape: bf16[128,128], index: 1, kind: input, shape index: {}]
  %s2 = inlined_call_operand.hbm [shape: bf16[128,128], index: 2, kind: input, shape index: {}]
  %s3 = inlined_call_operand.hbm [shape: bf16[128,128], index: 3, kind: input, shape index: {}]
  %s4 = inlined_call_operand.hbm [shape: bf16[256,128], index: 4, kind: input, shape index: {}]
  %s5 = inlined_call_operand.vmem [shape: f32[1,128], index: 5, kind: input, shape index: {}]
  %s6 = inlined_call_operand.hbm [shape: bf16[256,128], index: 6, kind: input, shape index: {}]
  %s7 = inlined_call_operand.vmem [shape: f32[1,128], index: 7, kind: input, shape index: {}]
  %s8 = inlined_call_operand.hbm [shape: bf16[256,128], index: 8, kind: input, shape index: {}]
  %s9 = inlined_call_operand.vmem [shape: f32[1,128], index: 9, kind: input, shape index: {}]
  %s10 = inlined_call_operand.hbm [shape: f32[128,128], index: 10, kind: output, shape index: {}]
  %s11 = sld [smem:[#allocation0]]
  $region78: #{tpu_custom_call.1} parent=0
    _
  %s13 = ssub.s32 1, %s11
  %s14 = scalar_select 0, %s13, %s11
  $region1: #{tpu_custom_call.1} parent=0
    #allocation2 [shape = 'u8[32768]{0}', space=vmem, size = 0x8000, scoped, tag = 'input window, operand 0, single buffered']
    #allocation3 [shape = 's32[1]{0}', space=sflag, size = 0x4, scoped, tag = 'scoped memory for tpu_custom_call.1']
    #allocation4 [shape = 's32[1]{0}', space=sflag, size = 0x4, scoped, tag = 'scoped memory for tpu_custom_call.1']
    #allocation5 [shape = 'u8[32768]{0}', space=vmem, size = 0x8000, scoped, tag = 'input window, operand 1, single buffered']
    #allocation6 [shape = 's32[1]{0}', space=sflag, size = 0x4, scoped, tag = 'scoped memory for tpu_custom_call.1']
    #allocation7 [shape = 'u8[32768]{0}', space=vmem, size = 0x8000, scoped, tag = 'input window, operand 2, single buffered']
    #allocation8 [shape = 'u8[32768]{0}', space=vmem, size = 0x8000, scoped, tag = 'input window, operand 3, single buffered']
    #allocation9 [shape = 's32[1]{0}', space=sflag, size = 0x4, scoped, tag = 'scoped memory for tpu_custom_call.1']
    #allocation10 [shape = 'u8[65536]{0}', space=vmem, size = 0x10000, scoped, tag = 'input window, operand 4, single buffered']
    #allocation11 [shape = 'u8[65536]{0}', space=vmem, size = 0x10000, scoped, tag = 'input window, operand 6, single buffered']
    #allocation12 [shape = 's32[1]{0}', space=sflag, size = 0x4, scoped, tag = 'scoped memory for tpu_custom_call.1']
    #allocation13 [shape = 'u8[65536]{0}', space=vmem, size = 0x10000, scoped, tag = 'input window, operand 8, single buffered']
    #allocation14 [shape = 'u8[65536]{0}', space=vmem, size = 0x10000, scoped, tag = 'output window, operand 0, single buffered']
    %15 = vsyncpa [#allocation3], 0
    %16 = vsyncpa [#allocation6], 0
    %17 = vsyncpa [#allocation9], 0
    %18 = vsyncpa [#allocation12], 0
    %19 = vsyncpa [#allocation4], 0
    // Predicated region
    $region2: #{tpu_custom_call.1} parent=1 // pred_check
      _
    $region3: #{tpu_custom_call.1} parent=1 // pred_check_branch
      %21 = sbr.rel (0) target = $region5
    $region4: #{tpu_custom_call.1} parent=1 // pred_region
      %s23 = ssub.s32 1024, 1024
      %24 = vsyncadd [#allocation3], %s23
      %s25 = sshll.u32 [#allocation2], 4
      %s26 = int_to_ptr.vmem [resolvable:$true] %s25
      %31 = dma.hbm_to_vmem [thread:$0]  %s0, 1024, %s26, [#allocation3], 64, 64, 4
    $region5: #{tpu_custom_call.1} parent=1 // pred_fallthru
      _
    // Predicated region
    $region6: #{tpu_custom_call.1} parent=1 // pred_check
      _
    $region7: #{tpu_custom_call.1} parent=1 // pred_check_branch
      %33 = sbr.rel (0) target = $region9
    $region8: #{tpu_custom_call.1} parent=1 // pred_region
      %s35 = ssub.s32 1024, 1024
      %36 = vsyncadd [#allocation6], %s35
      %s37 = sshll.u32 [#allocation5], 4
      %s38 = int_to_ptr.vmem [resolvable:$true] %s37
      %43 = dma.hbm_to_vmem [thread:$0]  %s1, 1024, %s38, [#allocation6], 64, 64, 4
    $region9: #{tpu_custom_call.1} parent=1 // pred_fallthru
      _
    // Predicated region
    $region10: #{tpu_custom_call.1} parent=1 // pred_check
      _
    $region11: #{tpu_custom_call.1} parent=1 // pred_check_branch
      %45 = sbr.rel (0) target = $region13
    $region12: #{tpu_custom_call.1} parent=1 // pred_region
      %s47 = ssub.s32 1024, 1024
      %48 = vsyncadd [#allocation6], %s47
      %s49 = sshll.u32 [#allocation7], 4
      %s50 = int_to_ptr.vmem [resolvable:$true] %s49
      %55 = dma.hbm_to_vmem [thread:$0]  %s2, 1024, %s50, [#allocation6], 64, 64, 4
    $region13: #{tpu_custom_call.1} parent=1 // pred_fallthru
      _
    // Predicated region
    $region14: #{tpu_custom_call.1} parent=1 // pred_check
      _
    $region15: #{tpu_custom_call.1} parent=1 // pred_check_branch
      %57 = sbr.rel (0) target = $region17
    $region16: #{tpu_custom_call.1} parent=1 // pred_region
      %s59 = ssub.s32 1024, 1024
      %60 = vsyncadd [#allocation9], %s59
      %s61 = sshll.u32 [#allocation8], 4
      %s62 = int_to_ptr.vmem [resolvable:$true] %s61
      %67 = dma.hbm_to_vmem [thread:$0]  %s3, 1024, %s62, [#allocation9], 64, 64, 4
    $region17: #{tpu_custom_call.1} parent=1 // pred_fallthru
      _
    // Predicated region
    $region18: #{tpu_custom_call.1} parent=1 // pred_check
      _
    $region19: #{tpu_custom_call.1} parent=1 // pred_check_branch
      %69 = sbr.rel (0) target = $region21
    $region20: #{tpu_custom_call.1} parent=1 // pred_region
      %s71 = ssub.s32 2048, 2048
      %72 = vsyncadd [#allocation9], %s71
      %s73 = sshll.u32 [#allocation10], 4
      %s74 = int_to_ptr.vmem [resolvable:$true] %s73
      %79 = dma.hbm_to_vmem [thread:$0]  %s4, 2048, %s74, [#allocation9], 64, 64, 4
    $region21: #{tpu_custom_call.1} parent=1 // pred_fallthru
      _
    // Predicated region
    $region22: #{tpu_custom_call.1} parent=1 // pred_check
      _
    $region23: #{tpu_custom_call.1} parent=1 // pred_check_branch
      %81 = sbr.rel (0) target = $region25
    $region24: #{tpu_custom_call.1} parent=1 // pred_region
      _
    $region25: #{tpu_custom_call.1} parent=1 // pred_fallthru
      _
    // Predicated region
    $region26: #{tpu_custom_call.1} parent=1 // pred_check
      _
    $region27: #{tpu_custom_call.1} parent=1 // pred_check_branch
      %83 = sbr.rel (0) target = $region29
    $region28: #{tpu_custom_call.1} parent=1 // pred_region
      %s85 = ssub.s32 2048, 2048
      %86 = vsyncadd [#allocation12], %s85
      %s87 = sshll.u32 [#allocation11], 4
      %s88 = int_to_ptr.vmem [resolvable:$true] %s87
      %93 = dma.hbm_to_vmem [thread:$0]  %s6, 2048, %s88, [#allocation12], 64, 64, 4
    $region29: #{tpu_custom_call.1} parent=1 // pred_fallthru
      _
    // Predicated region
    $region30: #{tpu_custom_call.1} parent=1 // pred_check
      _
    $region31: #{tpu_custom_call.1} parent=1 // pred_check_branch
      %95 = sbr.rel (0) target = $region33
    $region32: #{tpu_custom_call.1} parent=1 // pred_region
      _
    $region33: #{tpu_custom_call.1} parent=1 // pred_fallthru
      _
    // Predicated region
    $region34: #{tpu_custom_call.1} parent=1 // pred_check
      _
    $region35: #{tpu_custom_call.1} parent=1 // pred_check_branch
      %97 = sbr.rel (0) target = $region37
    $region36: #{tpu_custom_call.1} parent=1 // pred_region
      %s99 = ssub.s32 2048, 2048
      %100 = vsyncadd [#allocation12], %s99
      %s101 = sshll.u32 [#allocation13], 4
      %s102 = int_to_ptr.vmem [resolvable:$true] %s101
      %107 = dma.hbm_to_vmem [thread:$0]  %s8, 2048, %s102, [#allocation12], 64, 64, 4
    $region37: #{tpu_custom_call.1} parent=1 // pred_fallthru
      _
    // Predicated region
    $region38: #{tpu_custom_call.1} parent=1 // pred_check
      _
    $region39: #{tpu_custom_call.1} parent=1 // pred_check_branch
      %109 = sbr.rel (0) target = $region41
    $region40: #{tpu_custom_call.1} parent=1 // pred_region
      _
    $region41: #{tpu_custom_call.1} parent=1 // pred_fallthru
      _
    // Predicated region
    $region42: #{tpu_custom_call.1} parent=1 // pred_check
      _
    $region43: #{tpu_custom_call.1} parent=1 // pred_check_branch
      %111 = sbr.rel (0) target = $region45
    $region44: #{tpu_custom_call.1} parent=1 // pred_region
      %112 = dma.done [#allocation3], 1024
    $region45: #{tpu_custom_call.1} parent=1 // pred_fallthru
      _
    // Predicated region
    $region46: #{tpu_custom_call.1} parent=1 // pred_check
      _
    $region47: #{tpu_custom_call.1} parent=1 // pred_check_branch
      %114 = sbr.rel (0) target = $region49
    $region48: #{tpu_custom_call.1} parent=1 // pred_region
      %115 = dma.done [#allocation6], 1024
    $region49: #{tpu_custom_call.1} parent=1 // pred_fallthru
      _
    // Predicated region
    $region50: #{tpu_custom_call.1} parent=1 // pred_check
      _
    $region51: #{tpu_custom_call.1} parent=1 // pred_check_branch
      %117 = sbr.rel (0) target = $region53
    $region52: #{tpu_custom_call.1} parent=1 // pred_region
      %118 = dma.done [#allocation6], 1024
    $region53: #{tpu_custom_call.1} parent=1 // pred_fallthru
      _
    // Predicated region
    $region54: #{tpu_custom_call.1} parent=1 // pred_check
      _
    $region55: #{tpu_custom_call.1} parent=1 // pred_check_branch
      %120 = sbr.rel (0) target = $region57
    $region56: #{tpu_custom_call.1} parent=1 // pred_region
      %121 = dma.done [#allocation9], 1024
    $region57: #{tpu_custom_call.1} parent=1 // pred_fallthru
      _
    // Predicated region
    $region58: #{tpu_custom_call.1} parent=1 // pred_check
      _
    $region59: #{tpu_custom_call.1} parent=1 // pred_check_branch
      %123 = sbr.rel (0) target = $region61
    $region60: #{tpu_custom_call.1} parent=1 // pred_region
      %124 = dma.done [#allocation9], 2048
    $region61: #{tpu_custom_call.1} parent=1 // pred_fallthru
      _
    // Predicated region
    $region62: #{tpu_custom_call.1} parent=1 // pred_check
      _
    $region63: #{tpu_custom_call.1} parent=1 // pred_check_branch
      %126 = sbr.rel (0) target = $region65
    $region64: #{tpu_custom_call.1} parent=1 // pred_region
      %127 = dma.done [#allocation12], 2048
    $region65: #{tpu_custom_call.1} parent=1 // pred_fallthru
      _
    // Predicated region
    $region66: #{tpu_custom_call.1} parent=1 // pred_check
      _
    $region67: #{tpu_custom_call.1} parent=1 // pred_check_branch
      %129 = sbr.rel (0) target = $region69
    $region68: #{tpu_custom_call.1} parent=1 // pred_region
      %130 = dma.done [#allocation12], 2048
    $region69: #{tpu_custom_call.1} parent=1 // pred_fallthru
      _
    %v132 = vld [vmem:[#allocation8] sm:$0xf]
    %v133 = vld [vmem:[#allocation8 + $0x4] sm:$0xf]
    %v134 = vld [vmem:[#allocation8 + $0x8] sm:$0xf]
    %v135 = vld [vmem:[#allocation8 + $0xc] sm:$0xf]
    %v136 = vld [vmem:[#allocation8 + $0x10] sm:$0xf]
    %v137 = vld [vmem:[#allocation8 + $0x14] sm:$0xf]
    %v138 = vld [vmem:[#allocation8 + $0x18] sm:$0xf]
    %v139 = vld [vmem:[#allocation8 + $0x1c] sm:$0xf]
    %v140 = vld [vmem:[#allocation8 + $0x20] sm:$0xf]
    %v141 = vld [vmem:[#allocation8 + $0x24] sm:$0xf]
    %v142 = vld [vmem:[#allocation8 + $0x28] sm:$0xf]
    %v143 = vld [vmem:[#allocation8 + $0x2c] sm:$0xf]
    %v144 = vld [vmem:[#allocation8 + $0x30] sm:$0xf]
    %v145 = vld [vmem:[#allocation8 + $0x34] sm:$0xf]
    %v146 = vld [vmem:[#allocation8 + $0x38] sm:$0xf]
    %v147 = vld [vmem:[#allocation8 + $0x3c] sm:$0xf]
    %v148 = vld [vmem:[#allocation2] sm:$0xf]
    %v149 = vld [vmem:[#allocation2 + $0x4] sm:$0xf]
    %v150 = vld [vmem:[#allocation2 + $0x8] sm:$0xf]
    %v151 = vld [vmem:[#allocation2 + $0xc] sm:$0xf]
    %v152 = vld [vmem:[#allocation2 + $0x10] sm:$0xf]
    %v153 = vld [vmem:[#allocation2 + $0x14] sm:$0xf]
    %v154 = vld [vmem:[#allocation2 + $0x18] sm:$0xf]
    %v155 = vld [vmem:[#allocation2 + $0x1c] sm:$0xf]
    %v156 = vld [vmem:[#allocation2 + $0x20] sm:$0xf]
    %v157 = vld [vmem:[#allocation2 + $0x24] sm:$0xf]
    %v158 = vld [vmem:[#allocation2 + $0x28] sm:$0xf]
    %v159 = vld [vmem:[#allocation2 + $0x2c] sm:$0xf]
    %v160 = vld [vmem:[#allocation2 + $0x30] sm:$0xf]
    %v161 = vld [vmem:[#allocation2 + $0x34] sm:$0xf]
    %v162 = vld [vmem:[#allocation2 + $0x38] sm:$0xf]
    %v163 = vld [vmem:[#allocation2 + $0x3c] sm:$0xf]
    %v180 = vunpack.c.l.b16 %v148
    %v181 = vunpack.c.l.b16 %v149
    %v182 = vunpack.c.l.b16 %v150
    %v183 = vunpack.c.l.b16 %v151
    %v184 = vunpack.c.l.b16 %v152
    %v185 = vunpack.c.l.b16 %v153
    %v186 = vunpack.c.l.b16 %v154
    %v187 = vunpack.c.l.b16 %v155
    %v188 = vunpack.c.l.b16 %v156
    %v189 = vunpack.c.l.b16 %v157
    %v190 = vunpack.c.l.b16 %v158
    %v191 = vunpack.c.l.b16 %v159
    %v192 = vunpack.c.l.b16 %v160
    %v193 = vunpack.c.l.b16 %v161
    %v194 = vunpack.c.l.b16 %v162
    %v195 = vunpack.c.l.b16 %v163
    %v196 = vpack.c.b16 %v181, %v180
    %v197 = vpack.c.b16 %v183, %v182
    %v198 = vpack.c.b16 %v185, %v184
    %v199 = vpack.c.b16 %v187, %v186
    %v200 = vpack.c.b16 %v189, %v188
    %v201 = vpack.c.b16 %v191, %v190
    %v202 = vpack.c.b16 %v193, %v192
    %v203 = vpack.c.b16 %v195, %v194
    %v228 = vunpack.c.l.b16 %v132
    %v229 = vunpack.c.l.b16 %v133
    %v230 = vunpack.c.l.b16 %v134
    %v231 = vunpack.c.l.b16 %v135
    %v232 = vunpack.c.l.b16 %v136
    %v233 = vunpack.c.l.b16 %v137
    %v234 = vunpack.c.l.b16 %v138
    %v235 = vunpack.c.l.b16 %v139
    %v236 = vunpack.c.l.b16 %v140
    %v237 = vunpack.c.l.b16 %v141
    %v238 = vunpack.c.l.b16 %v142
    %v239 = vunpack.c.l.b16 %v143
    %v240 = vunpack.c.l.b16 %v144
    %v241 = vunpack.c.l.b16 %v145
    %v242 = vunpack.c.l.b16 %v146
    %v243 = vunpack.c.l.b16 %v147
    %v244 = vpack.c.b16 %v229, %v228
    %v245 = vpack.c.b16 %v231, %v230
    %v246 = vpack.c.b16 %v233, %v232
    %v247 = vpack.c.b16 %v235, %v234
    %v248 = vpack.c.b16 %v237, %v236
    %v249 = vpack.c.b16 %v239, %v238
    %v250 = vpack.c.b16 %v241, %v240
    %v251 = vpack.c.b16 %v243, %v242
    %260 = vmatprep.subr.bf16.mxu0 0
    %261 = vmatpush1.bf16.msra.mxu0 %v251
    %262 = vmatprep.subr.bf16.mxu0 0
    %263 = vmatpush1.bf16.msra.mxu0 %v250
    %264 = vmatprep.subr.bf16.mxu0 0
    %265 = vmatpush1.bf16.msra.mxu0 %v249
    %266 = vmatprep.subr.bf16.mxu0 0
    %267 = vmatpush1.bf16.msra.mxu0 %v248
    %268 = vmatprep.subr.bf16.mxu0 0
    %269 = vmatpush1.bf16.msra.mxu0 %v247
    %270 = vmatprep.subr.bf16.mxu0 0
    %271 = vmatpush1.bf16.msra.mxu0 %v246
    %272 = vmatprep.subr.bf16.mxu0 0
    %273 = vmatpush1.bf16.msra.mxu0 %v245
    %274 = vmatprep.subr.bf16.mxu0 0
    %275 = vmatpush1.bf16.msra.mxu0 %v244
    %276 = vmatprep.subr.bf16.mxu0 0
    %277 = vmatpush2.bf16.msra.mxu0 0
    %278 = vmatprep.subr.bf16.mxu0 0
    %279 = vmatpush2.bf16.msra.mxu0 0
    %280 = vmatprep.subr.bf16.mxu0 0
    %281 = vmatpush2.bf16.msra.mxu0 0
    %282 = vmatprep.subr.bf16.mxu0 0
    %283 = vmatpush2.bf16.msra.mxu0 0
    %284 = vmatprep.subr.bf16.mxu0 0
    %285 = vmatpush2.bf16.msra.mxu0 0
    %286 = vmatprep.subr.bf16.mxu0 0
    %287 = vmatpush2.bf16.msra.mxu0 0
    %288 = vmatprep.subr.bf16.mxu0 0
    %289 = vmatpush2.bf16.msra.mxu0 0
    %290 = vmatprep.subr.bf16.mxu0 0
    %291 = vmatpush2.bf16.msra.mxu0 0
    %292 = vmatprep.mubr.bf16.mxu0 0
    %293 = vmatmul.mubr.bf16.gmra.mxu0 %v196
    %v294 = vpop.f32.mrf.mxu0
    %v295 = vadd.f32 0.0, %v294
    %v296 = vpop.f32.mrf.mxu0
    %v297 = vpop.f32.mrf.mxu0
    %v298 = vadd.f32 0.0, %v297
    %v299 = vpop.f32.mrf.mxu0
    %300 = vmatprep.mubr.bf16.mxu0 0
    %301 = vmatmul.mubr.bf16.gmra.mxu0 %v197
    %v302 = vpop.f32.mrf.mxu0
    %v303 = vadd.f32 0.0, %v302
    %v304 = vpop.f32.mrf.mxu0
    %v305 = vpop.f32.mrf.mxu0
    %v306 = vadd.f32 0.0, %v305
    %v307 = vpop.f32.mrf.mxu0
    %308 = vmatprep.mubr.bf16.mxu0 0
    %309 = vmatmul.mubr.bf16.gmra.mxu0 %v198
    %v310 = vpop.f32.mrf.mxu0
    %v311 = vadd.f32 0.0, %v310
    %v312 = vpop.f32.mrf.mxu0
    %v313 = vpop.f32.mrf.mxu0
    %v314 = vadd.f32 0.0, %v313
    %v315 = vpop.f32.mrf.mxu0
    %316 = vmatprep.mubr.bf16.mxu0 0
    %317 = vmatmul.mubr.bf16.gmra.mxu0 %v199
    %v318 = vpop.f32.mrf.mxu0
    %v319 = vadd.f32 0.0, %v318
    %v320 = vpop.f32.mrf.mxu0
    %v321 = vpop.f32.mrf.mxu0
    %v322 = vadd.f32 0.0, %v321
    %v323 = vpop.f32.mrf.mxu0
    %324 = vmatprep.mubr.bf16.mxu0 0
    %325 = vmatmul.mubr.bf16.gmra.mxu0 %v200
    %v326 = vpop.f32.mrf.mxu0
    %v327 = vadd.f32 0.0, %v326
    %v328 = vpop.f32.mrf.mxu0
    %v329 = vpop.f32.mrf.mxu0
    %v330 = vadd.f32 0.0, %v329
    %v331 = vpop.f32.mrf.mxu0
    %332 = vmatprep.mubr.bf16.mxu0 0
    %333 = vmatmul.mubr.bf16.gmra.mxu0 %v201
    %v334 = vpop.f32.mrf.mxu0
    %v335 = vadd.f32 0.0, %v334
    %v336 = vpop.f32.mrf.mxu0
    %v337 = vpop.f32.mrf.mxu0
    %v338 = vadd.f32 0.0, %v337
    %v339 = vpop.f32.mrf.mxu0
    %340 = vmatprep.mubr.bf16.mxu0 0
    %341 = vmatmul.mubr.bf16.gmra.mxu0 %v202
    %v342 = vpop.f32.mrf.mxu0
    %v343 = vadd.f32 0.0, %v342
    %v344 = vpop.f32.mrf.mxu0
    %v345 = vpop.f32.mrf.mxu0
    %v346 = vadd.f32 0.0, %v345
    %v347 = vpop.f32.mrf.mxu0
    %348 = vmatprep.mubr.bf16.mxu0 0
    %349 = vmatmul.mubr.bf16.gmra.mxu0 %v203
    %v350 = vpop.f32.mrf.mxu0
    %v351 = vadd.f32 0.0, %v350
    %v352 = vpop.f32.mrf.mxu0
    %v353 = vpop.f32.mrf.mxu0
    %v354 = vadd.f32 0.0, %v353
    %v355 = vpop.f32.mrf.mxu0
    %356 = vdwg.mxu0
    %v357 = vpack.c.bf16 %v298, %v295
    %v358 = vpack.c.bf16 %v306, %v303
    %v359 = vpack.c.bf16 %v314, %v311
    %v360 = vpack.c.bf16 %v322, %v319
    %v361 = vpack.c.bf16 %v330, %v327
    %v362 = vpack.c.bf16 %v338, %v335
    %v363 = vpack.c.bf16 %v346, %v343
    %v364 = vpack.c.bf16 %v354, %v351
    %v365 = vld [vmem:[#allocation10] sm:$0xf]
    %v366 = vld [vmem:[#allocation10 + $0x4] sm:$0xf]
    %v367 = vld [vmem:[#allocation10 + $0x8] sm:$0xf]
    %v368 = vld [vmem:[#allocation10 + $0xc] sm:$0xf]
    %v369 = vld [vmem:[#allocation10 + $0x10] sm:$0xf]
    %v370 = vld [vmem:[#allocation10 + $0x14] sm:$0xf]
    %v371 = vld [vmem:[#allocation10 + $0x18] sm:$0xf]
    %v372 = vld [vmem:[#allocation10 + $0x1c] sm:$0xf]
    %v373 = vld [vmem:[#allocation10 + $0x20] sm:$0xf]
    %v374 = vld [vmem:[#allocation10 + $0x24] sm:$0xf]
    %v375 = vld [vmem:[#allocation10 + $0x28] sm:$0xf]
    %v376 = vld [vmem:[#allocation10 + $0x2c] sm:$0xf]
    %v377 = vld [vmem:[#allocation10 + $0x30] sm:$0xf]
    %v378 = vld [vmem:[#allocation10 + $0x34] sm:$0xf]
    %v379 = vld [vmem:[#allocation10 + $0x38] sm:$0xf]
    %v380 = vld [vmem:[#allocation10 + $0x3c] sm:$0xf]
    %v381 = vld [vmem:[#allocation10 + $0x40] sm:$0xf]
    %v382 = vld [vmem:[#allocation10 + $0x44] sm:$0xf]
    %v383 = vld [vmem:[#allocation10 + $0x48] sm:$0xf]
    %v384 = vld [vmem:[#allocation10 + $0x4c] sm:$0xf]
    %v385 = vld [vmem:[#allocation10 + $0x50] sm:$0xf]
    %v386 = vld [vmem:[#allocation10 + $0x54] sm:$0xf]
    %v387 = vld [vmem:[#allocation10 + $0x58] sm:$0xf]
    %v388 = vld [vmem:[#allocation10 + $0x5c] sm:$0xf]
    %v389 = vld [vmem:[#allocation10 + $0x60] sm:$0xf]
    %v390 = vld [vmem:[#allocation10 + $0x64] sm:$0xf]
    %v391 = vld [vmem:[#allocation10 + $0x68] sm:$0xf]
    %v392 = vld [vmem:[#allocation10 + $0x6c] sm:$0xf]
    %v393 = vld [vmem:[#allocation10 + $0x70] sm:$0xf]
    %v394 = vld [vmem:[#allocation10 + $0x74] sm:$0xf]
    %v395 = vld [vmem:[#allocation10 + $0x78] sm:$0xf]
    %v396 = vld [vmem:[#allocation10 + $0x7c] sm:$0xf]
    %v397 = vld [vmem:[%s5] sm:$0x1]
    %v399 = vlaneseq
    %v400 = vshrl.u32 %v399, 7
    %v401 = vsub.s32 0, %v400
    %v402 = vrot.slane %v397, %v401
    %v436 = vunpack.c.l.b16 %v365
    %v437 = vunpack.c.l.b16 %v366
    %v438 = vunpack.c.l.b16 %v367
    %v439 = vunpack.c.l.b16 %v368
    %v440 = vunpack.c.l.b16 %v369
    %v441 = vunpack.c.l.b16 %v370
    %v442 = vunpack.c.l.b16 %v371
    %v443 = vunpack.c.l.b16 %v372
    %v444 = vunpack.c.l.b16 %v373
    %v445 = vunpack.c.l.b16 %v374
    %v446 = vunpack.c.l.b16 %v375
    %v447 = vunpack.c.l.b16 %v376
    %v448 = vunpack.c.l.b16 %v377
    %v449 = vunpack.c.l.b16 %v378
    %v450 = vunpack.c.l.b16 %v379
    %v451 = vunpack.c.l.b16 %v380
    %v452 = vunpack.c.l.b16 %v381
    %v453 = vunpack.c.l.b16 %v382
    %v454 = vunpack.c.l.b16 %v383
    %v455 = vunpack.c.l.b16 %v384
    %v456 = vunpack.c.l.b16 %v385
    %v457 = vunpack.c.l.b16 %v386
    %v458 = vunpack.c.l.b16 %v387
    %v459 = vunpack.c.l.b16 %v388
    %v460 = vunpack.c.l.b16 %v389
    %v461 = vunpack.c.l.b16 %v390
    %v462 = vunpack.c.l.b16 %v391
    %v463 = vunpack.c.l.b16 %v392
    %v464 = vunpack.c.l.b16 %v393
    %v465 = vunpack.c.l.b16 %v394
    %v466 = vunpack.c.l.b16 %v395
    %v467 = vunpack.c.l.b16 %v396
    %v468 = vpack.c.b16 %v437, %v436
    %v469 = vpack.c.b16 %v439, %v438
    %v470 = vpack.c.b16 %v441, %v440
    %v471 = vpack.c.b16 %v443, %v442
    %v472 = vpack.c.b16 %v445, %v444
    %v473 = vpack.c.b16 %v447, %v446
    %v474 = vpack.c.b16 %v449, %v448
    %v475 = vpack.c.b16 %v451, %v450
    %v476 = vpack.c.b16 %v453, %v452
    %v477 = vpack.c.b16 %v455, %v454
    %v478 = vpack.c.b16 %v457, %v456
    %v479 = vpack.c.b16 %v459, %v458
    %v480 = vpack.c.b16 %v461, %v460
    %v481 = vpack.c.b16 %v463, %v462
    %v482 = vpack.c.b16 %v465, %v464
    %v483 = vpack.c.b16 %v467, %v466
    %500 = vmatprep.subr.bf16.mxu0 0
    %501 = vmatpush1.bf16.msra.mxu0 %v475
    %502 = vmatprep.subr.bf16.mxu0 0
    %503 = vmatpush1.bf16.msra.mxu0 %v474
    %504 = vmatprep.subr.bf16.mxu0 0
    %505 = vmatpush1.bf16.msra.mxu0 %v473
    %506 = vmatprep.subr.bf16.mxu0 0
    %507 = vmatpush1.bf16.msra.mxu0 %v472
    %508 = vmatprep.subr.bf16.mxu0 0
    %509 = vmatpush1.bf16.msra.mxu0 %v471
    %510 = vmatprep.subr.bf16.mxu0 0
    %511 = vmatpush1.bf16.msra.mxu0 %v470
    %512 = vmatprep.subr.bf16.mxu0 0
    %513 = vmatpush1.bf16.msra.mxu0 %v469
    %514 = vmatprep.subr.bf16.mxu0 0
    %515 = vmatpush1.bf16.msra.mxu0 %v468
    %516 = vmatprep.subr.bf16.mxu0 0
    %517 = vmatpush2.bf16.msra.mxu0 %v483
    %518 = vmatprep.subr.bf16.mxu0 0
    %519 = vmatpush2.bf16.msra.mxu0 %v482
    %520 = vmatprep.subr.bf16.mxu0 0
    %521 = vmatpush2.bf16.msra.mxu0 %v481
    %522 = vmatprep.subr.bf16.mxu0 0
    %523 = vmatpush2.bf16.msra.mxu0 %v480
    %524 = vmatprep.subr.bf16.mxu0 0
    %525 = vmatpush2.bf16.msra.mxu0 %v479
    %526 = vmatprep.subr.bf16.mxu0 0
    %527 = vmatpush2.bf16.msra.mxu0 %v478
    %528 = vmatprep.subr.bf16.mxu0 0
    %529 = vmatpush2.bf16.msra.mxu0 %v477
    %530 = vmatprep.subr.bf16.mxu0 0
    %531 = vmatpush2.bf16.msra.mxu0 %v476
    %532 = vmatprep.mubr.bf16.mxu0 %v357
    %533 = vmatmul.mubr.bf16.gmra.mxu0 %v244
    %v534 = vpop.f32.mrf.mxu0
    %v535 = vadd.f32 %v402, %v534
    %v536 = vpop.f32.mrf.mxu0
    %v537 = vpop.f32.mrf.mxu0
    %v538 = vadd.f32 %v402, %v537
    %v539 = vpop.f32.mrf.mxu0
    %540 = vmatprep.mubr.bf16.mxu0 %v358
    %541 = vmatmul.mubr.bf16.gmra.mxu0 %v245
    %v542 = vpop.f32.mrf.mxu0
    %v543 = vadd.f32 %v402, %v542
    %v544 = vpop.f32.mrf.mxu0
    %v545 = vpop.f32.mrf.mxu0
    %v546 = vadd.f32 %v402, %v545
    %v547 = vpop.f32.mrf.mxu0
    %548 = vmatprep.mubr.bf16.mxu0 %v359
    %549 = vmatmul.mubr.bf16.gmra.mxu0 %v246
    %v550 = vpop.f32.mrf.mxu0
    %v551 = vadd.f32 %v402, %v550
    %v552 = vpop.f32.mrf.mxu0
    %v553 = vpop.f32.mrf.mxu0
    %v554 = vadd.f32 %v402, %v553
    %v555 = vpop.f32.mrf.mxu0
    %556 = vmatprep.mubr.bf16.mxu0 %v360
    %557 = vmatmul.mubr.bf16.gmra.mxu0 %v247
    %v558 = vpop.f32.mrf.mxu0
    %v559 = vadd.f32 %v402, %v558
    %v560 = vpop.f32.mrf.mxu0
    %v561 = vpop.f32.mrf.mxu0
    %v562 = vadd.f32 %v402, %v561
    %v563 = vpop.f32.mrf.mxu0
    %564 = vmatprep.mubr.bf16.mxu0 %v361
    %565 = vmatmul.mubr.bf16.gmra.mxu0 %v248
    %v566 = vpop.f32.mrf.mxu0
    %v567 = vadd.f32 %v402, %v566
    %v568 = vpop.f32.mrf.mxu0
    %v569 = vpop.f32.mrf.mxu0
    %v570 = vadd.f32 %v402, %v569
    %v571 = vpop.f32.mrf.mxu0
    %572 = vmatprep.mubr.bf16.mxu0 %v362
    %573 = vmatmul.mubr.bf16.gmra.mxu0 %v249
    %v574 = vpop.f32.mrf.mxu0
    %v575 = vadd.f32 %v402, %v574
    %v576 = vpop.f32.mrf.mxu0
    %v577 = vpop.f32.mrf.mxu0
    %v578 = vadd.f32 %v402, %v577
    %v579 = vpop.f32.mrf.mxu0
    %580 = vmatprep.mubr.bf16.mxu0 %v363
    %581 = vmatmul.mubr.bf16.gmra.mxu0 %v250
    %v582 = vpop.f32.mrf.mxu0
    %v583 = vadd.f32 %v402, %v582
    %v584 = vpop.f32.mrf.mxu0
    %v585 = vpop.f32.mrf.mxu0
    %v586 = vadd.f32 %v402, %v585
    %v587 = vpop.f32.mrf.mxu0
    %588 = vmatprep.mubr.bf16.mxu0 %v364
    %589 = vmatmul.mubr.bf16.gmra.mxu0 %v251
    %v590 = vpop.f32.mrf.mxu0
    %v591 = vadd.f32 %v402, %v590
    %v592 = vpop.f32.mrf.mxu0
    %v593 = vpop.f32.mrf.mxu0
    %v594 = vadd.f32 %v402, %v593
    %v595 = vpop.f32.mrf.mxu0
    %596 = vdwg.mxu0
    %v597 = vmax.f32 %v535, 0.0
    %v598 = vmax.f32 %v538, 0.0
    %v599 = vmax.f32 %v543, 0.0
    %v600 = vmax.f32 %v546, 0.0
    %v601 = vmax.f32 %v551, 0.0
    %v602 = vmax.f32 %v554, 0.0
    %v603 = vmax.f32 %v559, 0.0
    %v604 = vmax.f32 %v562, 0.0
    %v605 = vmax.f32 %v567, 0.0
    %v606 = vmax.f32 %v570, 0.0
    %v607 = vmax.f32 %v575, 0.0
    %v608 = vmax.f32 %v578, 0.0
    %v609 = vmax.f32 %v583, 0.0
    %v610 = vmax.f32 %v586, 0.0
    %v611 = vmax.f32 %v591, 0.0
    %v612 = vmax.f32 %v594, 0.0
    %v613 = vpack.c.bf16 %v598, %v597
    %v614 = vpack.c.bf16 %v600, %v599
    %v615 = vpack.c.bf16 %v602, %v601
    %v616 = vpack.c.bf16 %v604, %v603
    %v617 = vpack.c.bf16 %v606, %v605
    %v618 = vpack.c.bf16 %v608, %v607
    %v619 = vpack.c.bf16 %v610, %v609
    %v620 = vpack.c.bf16 %v612, %v611
    %v621 = vld [vmem:[#allocation5] sm:$0xf]
    %v622 = vld [vmem:[#allocation5 + $0x4] sm:$0xf]
    %v623 = vld [vmem:[#allocation5 + $0x8] sm:$0xf]
    %v624 = vld [vmem:[#allocation5 + $0xc] sm:$0xf]
    %v625 = vld [vmem:[#allocation5 + $0x10] sm:$0xf]
    %v626 = vld [vmem:[#allocation5 + $0x14] sm:$0xf]
    %v627 = vld [vmem:[#allocation5 + $0x18] sm:$0xf]
    %v628 = vld [vmem:[#allocation5 + $0x1c] sm:$0xf]
    %v629 = vld [vmem:[#allocation5 + $0x20] sm:$0xf]
    %v630 = vld [vmem:[#allocation5 + $0x24] sm:$0xf]
    %v631 = vld [vmem:[#allocation5 + $0x28] sm:$0xf]
    %v632 = vld [vmem:[#allocation5 + $0x2c] sm:$0xf]
    %v633 = vld [vmem:[#allocation5 + $0x30] sm:$0xf]
    %v634 = vld [vmem:[#allocation5 + $0x34] sm:$0xf]
    %v635 = vld [vmem:[#allocation5 + $0x38] sm:$0xf]
    %v636 = vld [vmem:[#allocation5 + $0x3c] sm:$0xf]
    %v653 = vunpack.c.l.b16 %v621
    %v654 = vunpack.c.l.b16 %v622
    %v655 = vunpack.c.l.b16 %v623
    %v656 = vunpack.c.l.b16 %v624
    %v657 = vunpack.c.l.b16 %v625
    %v658 = vunpack.c.l.b16 %v626
    %v659 = vunpack.c.l.b16 %v627
    %v660 = vunpack.c.l.b16 %v628
    %v661 = vunpack.c.l.b16 %v629
    %v662 = vunpack.c.l.b16 %v630
    %v663 = vunpack.c.l.b16 %v631
    %v664 = vunpack.c.l.b16 %v632
    %v665 = vunpack.c.l.b16 %v633
    %v666 = vunpack.c.l.b16 %v634
    %v667 = vunpack.c.l.b16 %v635
    %v668 = vunpack.c.l.b16 %v636
    %v669 = vpack.c.b16 %v654, %v653
    %v670 = vpack.c.b16 %v656, %v655
    %v671 = vpack.c.b16 %v658, %v657
    %v672 = vpack.c.b16 %v660, %v659
    %v673 = vpack.c.b16 %v662, %v661
    %v674 = vpack.c.b16 %v664, %v663
    %v675 = vpack.c.b16 %v666, %v665
    %v676 = vpack.c.b16 %v668, %v667
    %685 = vmatprep.subr.bf16.mxu0 0
    %686 = vmatpush1.bf16.msra.mxu0 %v620
    %687 = vmatprep.subr.bf16.mxu0 0
    %688 = vmatpush1.bf16.msra.mxu0 %v619
    %689 = vmatprep.subr.bf16.mxu0 0
    %690 = vmatpush1.bf16.msra.mxu0 %v618
    %691 = vmatprep.subr.bf16.mxu0 0
    %692 = vmatpush1.bf16.msra.mxu0 %v617
    %693 = vmatprep.subr.bf16.mxu0 0
    %694 = vmatpush1.bf16.msra.mxu0 %v616
    %695 = vmatprep.subr.bf16.mxu0 0
    %696 = vmatpush1.bf16.msra.mxu0 %v615
    %697 = vmatprep.subr.bf16.mxu0 0
    %698 = vmatpush1.bf16.msra.mxu0 %v614
    %699 = vmatprep.subr.bf16.mxu0 0
    %700 = vmatpush1.bf16.msra.mxu0 %v613
    %701 = vmatprep.subr.bf16.mxu0 0
    %702 = vmatpush2.bf16.msra.mxu0 0
    %703 = vmatprep.subr.bf16.mxu0 0
    %704 = vmatpush2.bf16.msra.mxu0 0
    %705 = vmatprep.subr.bf16.mxu0 0
    %706 = vmatpush2.bf16.msra.mxu0 0
    %707 = vmatprep.subr.bf16.mxu0 0
    %708 = vmatpush2.bf16.msra.mxu0 0
    %709 = vmatprep.subr.bf16.mxu0 0
    %710 = vmatpush2.bf16.msra.mxu0 0
    %711 = vmatprep.subr.bf16.mxu0 0
    %712 = vmatpush2.bf16.msra.mxu0 0
    %713 = vmatprep.subr.bf16.mxu0 0
    %714 = vmatpush2.bf16.msra.mxu0 0
    %715 = vmatprep.subr.bf16.mxu0 0
    %716 = vmatpush2.bf16.msra.mxu0 0
    %717 = vmatprep.mubr.bf16.mxu0 0
    %718 = vmatmul.mubr.bf16.gmra.mxu0 %v669
    %v719 = vpop.f32.mrf.mxu0
    %v720 = vadd.f32 0.0, %v719
    %v721 = vpop.f32.mrf.mxu0
    %v722 = vpop.f32.mrf.mxu0
    %v723 = vadd.f32 0.0, %v722
    %v724 = vpop.f32.mrf.mxu0
    %725 = vmatprep.mubr.bf16.mxu0 0
    %726 = vmatmul.mubr.bf16.gmra.mxu0 %v670
    %v727 = vpop.f32.mrf.mxu0
    %v728 = vadd.f32 0.0, %v727
    %v729 = vpop.f32.mrf.mxu0
    %v730 = vpop.f32.mrf.mxu0
    %v731 = vadd.f32 0.0, %v730
    %v732 = vpop.f32.mrf.mxu0
    %733 = vmatprep.mubr.bf16.mxu0 0
    %734 = vmatmul.mubr.bf16.gmra.mxu0 %v671
    %v735 = vpop.f32.mrf.mxu0
    %v736 = vadd.f32 0.0, %v735
    %v737 = vpop.f32.mrf.mxu0
    %v738 = vpop.f32.mrf.mxu0
    %v739 = vadd.f32 0.0, %v738
    %v740 = vpop.f32.mrf.mxu0
    %741 = vmatprep.mubr.bf16.mxu0 0
    %742 = vmatmul.mubr.bf16.gmra.mxu0 %v672
    %v743 = vpop.f32.mrf.mxu0
    %v744 = vadd.f32 0.0, %v743
    %v745 = vpop.f32.mrf.mxu0
    %v746 = vpop.f32.mrf.mxu0
    %v747 = vadd.f32 0.0, %v746
    %v748 = vpop.f32.mrf.mxu0
    %749 = vmatprep.mubr.bf16.mxu0 0
    %750 = vmatmul.mubr.bf16.gmra.mxu0 %v673
    %v751 = vpop.f32.mrf.mxu0
    %v752 = vadd.f32 0.0, %v751
    %v753 = vpop.f32.mrf.mxu0
    %v754 = vpop.f32.mrf.mxu0
    %v755 = vadd.f32 0.0, %v754
    %v756 = vpop.f32.mrf.mxu0
    %757 = vmatprep.mubr.bf16.mxu0 0
    %758 = vmatmul.mubr.bf16.gmra.mxu0 %v674
    %v759 = vpop.f32.mrf.mxu0
    %v760 = vadd.f32 0.0, %v759
    %v761 = vpop.f32.mrf.mxu0
    %v762 = vpop.f32.mrf.mxu0
    %v763 = vadd.f32 0.0, %v762
    %v764 = vpop.f32.mrf.mxu0
    %765 = vmatprep.mubr.bf16.mxu0 0
    %766 = vmatmul.mubr.bf16.gmra.mxu0 %v675
    %v767 = vpop.f32.mrf.mxu0
    %v768 = vadd.f32 0.0, %v767
    %v769 = vpop.f32.mrf.mxu0
    %v770 = vpop.f32.mrf.mxu0
    %v771 = vadd.f32 0.0, %v770
    %v772 = vpop.f32.mrf.mxu0
    %773 = vmatprep.mubr.bf16.mxu0 0
    %774 = vmatmul.mubr.bf16.gmra.mxu0 %v676
    %v775 = vpop.f32.mrf.mxu0
    %v776 = vadd.f32 0.0, %v775
    %v777 = vpop.f32.mrf.mxu0
    %v778 = vpop.f32.mrf.mxu0
    %v779 = vadd.f32 0.0, %v778
    %v780 = vpop.f32.mrf.mxu0
    %781 = vdwg.mxu0
    %v782 = vpack.c.bf16 %v723, %v720
    %v783 = vpack.c.bf16 %v731, %v728
    %v784 = vpack.c.bf16 %v739, %v736
    %v785 = vpack.c.bf16 %v747, %v744
    %v786 = vpack.c.bf16 %v755, %v752
    %v787 = vpack.c.bf16 %v763, %v760
    %v788 = vpack.c.bf16 %v771, %v768
    %v789 = vpack.c.bf16 %v779, %v776
    %v790 = vld [vmem:[#allocation11] sm:$0xf]
    %v791 = vld [vmem:[#allocation11 + $0x4] sm:$0xf]
    %v792 = vld [vmem:[#allocation11 + $0x8] sm:$0xf]
    %v793 = vld [vmem:[#allocation11 + $0xc] sm:$0xf]
    %v794 = vld [vmem:[#allocation11 + $0x10] sm:$0xf]
    %v795 = vld [vmem:[#allocation11 + $0x14] sm:$0xf]
    %v796 = vld [vmem:[#allocation11 + $0x18] sm:$0xf]
    %v797 = vld [vmem:[#allocation11 + $0x1c] sm:$0xf]
    %v798 = vld [vmem:[#allocation11 + $0x20] sm:$0xf]
    %v799 = vld [vmem:[#allocation11 + $0x24] sm:$0xf]
    %v800 = vld [vmem:[#allocation11 + $0x28] sm:$0xf]
    %v801 = vld [vmem:[#allocation11 + $0x2c] sm:$0xf]
    %v802 = vld [vmem:[#allocation11 + $0x30] sm:$0xf]
    %v803 = vld [vmem:[#allocation11 + $0x34] sm:$0xf]
    %v804 = vld [vmem:[#allocation11 + $0x38] sm:$0xf]
    %v805 = vld [vmem:[#allocation11 + $0x3c] sm:$0xf]
    %v806 = vld [vmem:[#allocation11 + $0x40] sm:$0xf]
    %v807 = vld [vmem:[#allocation11 + $0x44] sm:$0xf]
    %v808 = vld [vmem:[#allocation11 + $0x48] sm:$0xf]
    %v809 = vld [vmem:[#allocation11 + $0x4c] sm:$0xf]
    %v810 = vld [vmem:[#allocation11 + $0x50] sm:$0xf]
    %v811 = vld [vmem:[#allocation11 + $0x54] sm:$0xf]
    %v812 = vld [vmem:[#allocation11 + $0x58] sm:$0xf]
    %v813 = vld [vmem:[#allocation11 + $0x5c] sm:$0xf]
    %v814 = vld [vmem:[#allocation11 + $0x60] sm:$0xf]
    %v815 = vld [vmem:[#allocation11 + $0x64] sm:$0xf]
    %v816 = vld [vmem:[#allocation11 + $0x68] sm:$0xf]
    %v817 = vld [vmem:[#allocation11 + $0x6c] sm:$0xf]
    %v818 = vld [vmem:[#allocation11 + $0x70] sm:$0xf]
    %v819 = vld [vmem:[#allocation11 + $0x74] sm:$0xf]
    %v820 = vld [vmem:[#allocation11 + $0x78] sm:$0xf]
    %v821 = vld [vmem:[#allocation11 + $0x7c] sm:$0xf]
    %v822 = vld [vmem:[%s7] sm:$0x1]
    %v824 = vlaneseq
    %v825 = vshrl.u32 %v824, 7
    %v826 = vsub.s32 0, %v825
    %v827 = vrot.slane %v822, %v826
    %v861 = vunpack.c.l.b16 %v790
    %v862 = vunpack.c.l.b16 %v791
    %v863 = vunpack.c.l.b16 %v792
    %v864 = vunpack.c.l.b16 %v793
    %v865 = vunpack.c.l.b16 %v794
    %v866 = vunpack.c.l.b16 %v795
    %v867 = vunpack.c.l.b16 %v796
    %v868 = vunpack.c.l.b16 %v797
    %v869 = vunpack.c.l.b16 %v798
    %v870 = vunpack.c.l.b16 %v799
    %v871 = vunpack.c.l.b16 %v800
    %v872 = vunpack.c.l.b16 %v801
    %v873 = vunpack.c.l.b16 %v802
    %v874 = vunpack.c.l.b16 %v803
    %v875 = vunpack.c.l.b16 %v804
    %v876 = vunpack.c.l.b16 %v805
    %v877 = vunpack.c.l.b16 %v806
    %v878 = vunpack.c.l.b16 %v807
    %v879 = vunpack.c.l.b16 %v808
    %v880 = vunpack.c.l.b16 %v809
    %v881 = vunpack.c.l.b16 %v810
    %v882 = vunpack.c.l.b16 %v811
    %v883 = vunpack.c.l.b16 %v812
    %v884 = vunpack.c.l.b16 %v813
    %v885 = vunpack.c.l.b16 %v814
    %v886 = vunpack.c.l.b16 %v815
    %v887 = vunpack.c.l.b16 %v816
    %v888 = vunpack.c.l.b16 %v817
    %v889 = vunpack.c.l.b16 %v818
    %v890 = vunpack.c.l.b16 %v819
    %v891 = vunpack.c.l.b16 %v820
    %v892 = vunpack.c.l.b16 %v821
    %v893 = vpack.c.b16 %v862, %v861
    %v894 = vpack.c.b16 %v864, %v863
    %v895 = vpack.c.b16 %v866, %v865
    %v896 = vpack.c.b16 %v868, %v867
    %v897 = vpack.c.b16 %v870, %v869
    %v898 = vpack.c.b16 %v872, %v871
    %v899 = vpack.c.b16 %v874, %v873
    %v900 = vpack.c.b16 %v876, %v875
    %v901 = vpack.c.b16 %v878, %v877
    %v902 = vpack.c.b16 %v880, %v879
    %v903 = vpack.c.b16 %v882, %v881
    %v904 = vpack.c.b16 %v884, %v883
    %v905 = vpack.c.b16 %v886, %v885
    %v906 = vpack.c.b16 %v888, %v887
    %v907 = vpack.c.b16 %v890, %v889
    %v908 = vpack.c.b16 %v892, %v891
    %925 = vmatprep.subr.bf16.mxu0 0
    %926 = vmatpush1.bf16.msra.mxu0 %v900
    %927 = vmatprep.subr.bf16.mxu0 0
    %928 = vmatpush1.bf16.msra.mxu0 %v899
    %929 = vmatprep.subr.bf16.mxu0 0
    %930 = vmatpush1.bf16.msra.mxu0 %v898
    %931 = vmatprep.subr.bf16.mxu0 0
    %932 = vmatpush1.bf16.msra.mxu0 %v897
    %933 = vmatprep.subr.bf16.mxu0 0
    %934 = vmatpush1.bf16.msra.mxu0 %v896
    %935 = vmatprep.subr.bf16.mxu0 0
    %936 = vmatpush1.bf16.msra.mxu0 %v895
    %937 = vmatprep.subr.bf16.mxu0 0
    %938 = vmatpush1.bf16.msra.mxu0 %v894
    %939 = vmatprep.subr.bf16.mxu0 0
    %940 = vmatpush1.bf16.msra.mxu0 %v893
    %941 = vmatprep.subr.bf16.mxu0 0
    %942 = vmatpush2.bf16.msra.mxu0 %v908
    %943 = vmatprep.subr.bf16.mxu0 0
    %944 = vmatpush2.bf16.msra.mxu0 %v907
    %945 = vmatprep.subr.bf16.mxu0 0
    %946 = vmatpush2.bf16.msra.mxu0 %v906
    %947 = vmatprep.subr.bf16.mxu0 0
    %948 = vmatpush2.bf16.msra.mxu0 %v905
    %949 = vmatprep.subr.bf16.mxu0 0
    %950 = vmatpush2.bf16.msra.mxu0 %v904
    %951 = vmatprep.subr.bf16.mxu0 0
    %952 = vmatpush2.bf16.msra.mxu0 %v903
    %953 = vmatprep.subr.bf16.mxu0 0
    %954 = vmatpush2.bf16.msra.mxu0 %v902
    %955 = vmatprep.subr.bf16.mxu0 0
    %956 = vmatpush2.bf16.msra.mxu0 %v901
    %957 = vmatprep.mubr.bf16.mxu0 %v782
    %958 = vmatmul.mubr.bf16.gmra.mxu0 %v613
    %v959 = vpop.f32.mrf.mxu0
    %v960 = vadd.f32 %v827, %v959
    %v961 = vpop.f32.mrf.mxu0
    %v962 = vpop.f32.mrf.mxu0
    %v963 = vadd.f32 %v827, %v962
    %v964 = vpop.f32.mrf.mxu0
    %965 = vmatprep.mubr.bf16.mxu0 %v783
    %966 = vmatmul.mubr.bf16.gmra.mxu0 %v614
    %v967 = vpop.f32.mrf.mxu0
    %v968 = vadd.f32 %v827, %v967
    %v969 = vpop.f32.mrf.mxu0
    %v970 = vpop.f32.mrf.mxu0
    %v971 = vadd.f32 %v827, %v970
    %v972 = vpop.f32.mrf.mxu0
    %973 = vmatprep.mubr.bf16.mxu0 %v784
    %974 = vmatmul.mubr.bf16.gmra.mxu0 %v615
    %v975 = vpop.f32.mrf.mxu0
    %v976 = vadd.f32 %v827, %v975
    %v977 = vpop.f32.mrf.mxu0
    %v978 = vpop.f32.mrf.mxu0
    %v979 = vadd.f32 %v827, %v978
    %v980 = vpop.f32.mrf.mxu0
    %981 = vmatprep.mubr.bf16.mxu0 %v785
    %982 = vmatmul.mubr.bf16.gmra.mxu0 %v616
    %v983 = vpop.f32.mrf.mxu0
    %v984 = vadd.f32 %v827, %v983
    %v985 = vpop.f32.mrf.mxu0
    %v986 = vpop.f32.mrf.mxu0
    %v987 = vadd.f32 %v827, %v986
    %v988 = vpop.f32.mrf.mxu0
    %989 = vmatprep.mubr.bf16.mxu0 %v786
    %990 = vmatmul.mubr.bf16.gmra.mxu0 %v617
    %v991 = vpop.f32.mrf.mxu0
    %v992 = vadd.f32 %v827, %v991
    %v993 = vpop.f32.mrf.mxu0
    %v994 = vpop.f32.mrf.mxu0
    %v995 = vadd.f32 %v827, %v994
    %v996 = vpop.f32.mrf.mxu0
    %997 = vmatprep.mubr.bf16.mxu0 %v787
    %998 = vmatmul.mubr.bf16.gmra.mxu0 %v618
    %v999 = vpop.f32.mrf.mxu0
    %v1000 = vadd.f32 %v827, %v999
    %v1001 = vpop.f32.mrf.mxu0
    %v1002 = vpop.f32.mrf.mxu0
    %v1003 = vadd.f32 %v827, %v1002
    %v1004 = vpop.f32.mrf.mxu0
    %1005 = vmatprep.mubr.bf16.mxu0 %v788
    %1006 = vmatmul.mubr.bf16.gmra.mxu0 %v619
    %v1007 = vpop.f32.mrf.mxu0
    %v1008 = vadd.f32 %v827, %v1007
    %v1009 = vpop.f32.mrf.mxu0
    %v1010 = vpop.f32.mrf.mxu0
    %v1011 = vadd.f32 %v827, %v1010
    %v1012 = vpop.f32.mrf.mxu0
    %1013 = vmatprep.mubr.bf16.mxu0 %v789
    %1014 = vmatmul.mubr.bf16.gmra.mxu0 %v620
    %v1015 = vpop.f32.mrf.mxu0
    %v1016 = vadd.f32 %v827, %v1015
    %v1017 = vpop.f32.mrf.mxu0
    %v1018 = vpop.f32.mrf.mxu0
    %v1019 = vadd.f32 %v827, %v1018
    %v1020 = vpop.f32.mrf.mxu0
    %1021 = vdwg.mxu0
    %v1022 = vmax.f32 %v960, 0.0
    %v1023 = vmax.f32 %v963, 0.0
    %v1024 = vmax.f32 %v968, 0.0
    %v1025 = vmax.f32 %v971, 0.0
    %v1026 = vmax.f32 %v976, 0.0
    %v1027 = vmax.f32 %v979, 0.0
    %v1028 = vmax.f32 %v984, 0.0
    %v1029 = vmax.f32 %v987, 0.0
    %v1030 = vmax.f32 %v992, 0.0
    %v1031 = vmax.f32 %v995, 0.0
    %v1032 = vmax.f32 %v1000, 0.0
    %v1033 = vmax.f32 %v1003, 0.0
    %v1034 = vmax.f32 %v1008, 0.0
    %v1035 = vmax.f32 %v1011, 0.0
    %v1036 = vmax.f32 %v1016, 0.0
    %v1037 = vmax.f32 %v1019, 0.0
    %v1038 = vpack.c.bf16 %v1023, %v1022
    %v1039 = vpack.c.bf16 %v1025, %v1024
    %v1040 = vpack.c.bf16 %v1027, %v1026
    %v1041 = vpack.c.bf16 %v1029, %v1028
    %v1042 = vpack.c.bf16 %v1031, %v1030
    %v1043 = vpack.c.bf16 %v1033, %v1032
    %v1044 = vpack.c.bf16 %v1035, %v1034
    %v1045 = vpack.c.bf16 %v1037, %v1036
    %v1046 = vld [vmem:[#allocation7] sm:$0xf]
    %v1047 = vld [vmem:[#allocation7 + $0x4] sm:$0xf]
    %v1048 = vld [vmem:[#allocation7 + $0x8] sm:$0xf]
    %v1049 = vld [vmem:[#allocation7 + $0xc] sm:$0xf]
    %v1050 = vld [vmem:[#allocation7 + $0x10] sm:$0xf]
    %v1051 = vld [vmem:[#allocation7 + $0x14] sm:$0xf]
    %v1052 = vld [vmem:[#allocation7 + $0x18] sm:$0xf]
    %v1053 = vld [vmem:[#allocation7 + $0x1c] sm:$0xf]
    %v1054 = vld [vmem:[#allocation7 + $0x20] sm:$0xf]
    %v1055 = vld [vmem:[#allocation7 + $0x24] sm:$0xf]
    %v1056 = vld [vmem:[#allocation7 + $0x28] sm:$0xf]
    %v1057 = vld [vmem:[#allocation7 + $0x2c] sm:$0xf]
    %v1058 = vld [vmem:[#allocation7 + $0x30] sm:$0xf]
    %v1059 = vld [vmem:[#allocation7 + $0x34] sm:$0xf]
    %v1060 = vld [vmem:[#allocation7 + $0x38] sm:$0xf]
    %v1061 = vld [vmem:[#allocation7 + $0x3c] sm:$0xf]
    %v1078 = vunpack.c.l.b16 %v1046
    %v1079 = vunpack.c.l.b16 %v1047
    %v1080 = vunpack.c.l.b16 %v1048
    %v1081 = vunpack.c.l.b16 %v1049
    %v1082 = vunpack.c.l.b16 %v1050
    %v1083 = vunpack.c.l.b16 %v1051
    %v1084 = vunpack.c.l.b16 %v1052
    %v1085 = vunpack.c.l.b16 %v1053
    %v1086 = vunpack.c.l.b16 %v1054
    %v1087 = vunpack.c.l.b16 %v1055
    %v1088 = vunpack.c.l.b16 %v1056
    %v1089 = vunpack.c.l.b16 %v1057
    %v1090 = vunpack.c.l.b16 %v1058
    %v1091 = vunpack.c.l.b16 %v1059
    %v1092 = vunpack.c.l.b16 %v1060
    %v1093 = vunpack.c.l.b16 %v1061
    %v1094 = vpack.c.b16 %v1079, %v1078
    %v1095 = vpack.c.b16 %v1081, %v1080
    %v1096 = vpack.c.b16 %v1083, %v1082
    %v1097 = vpack.c.b16 %v1085, %v1084
    %v1098 = vpack.c.b16 %v1087, %v1086
    %v1099 = vpack.c.b16 %v1089, %v1088
    %v1100 = vpack.c.b16 %v1091, %v1090
    %v1101 = vpack.c.b16 %v1093, %v1092
    %1110 = vmatprep.subr.bf16.mxu0 0
    %1111 = vmatpush1.bf16.msra.mxu0 %v1045
    %1112 = vmatprep.subr.bf16.mxu0 0
    %1113 = vmatpush1.bf16.msra.mxu0 %v1044
    %1114 = vmatprep.subr.bf16.mxu0 0
    %1115 = vmatpush1.bf16.msra.mxu0 %v1043
    %1116 = vmatprep.subr.bf16.mxu0 0
    %1117 = vmatpush1.bf16.msra.mxu0 %v1042
    %1118 = vmatprep.subr.bf16.mxu0 0
    %1119 = vmatpush1.bf16.msra.mxu0 %v1041
    %1120 = vmatprep.subr.bf16.mxu0 0
    %1121 = vmatpush1.bf16.msra.mxu0 %v1040
    %1122 = vmatprep.subr.bf16.mxu0 0
    %1123 = vmatpush1.bf16.msra.mxu0 %v1039
    %1124 = vmatprep.subr.bf16.mxu0 0
    %1125 = vmatpush1.bf16.msra.mxu0 %v1038
    %1126 = vmatprep.subr.bf16.mxu0 0
    %1127 = vmatpush2.bf16.msra.mxu0 0
    %1128 = vmatprep.subr.bf16.mxu0 0
    %1129 = vmatpush2.bf16.msra.mxu0 0
    %1130 = vmatprep.subr.bf16.mxu0 0
    %1131 = vmatpush2.bf16.msra.mxu0 0
    %1132 = vmatprep.subr.bf16.mxu0 0
    %1133 = vmatpush2.bf16.msra.mxu0 0
    %1134 = vmatprep.subr.bf16.mxu0 0
    %1135 = vmatpush2.bf16.msra.mxu0 0
    %1136 = vmatprep.subr.bf16.mxu0 0
    %1137 = vmatpush2.bf16.msra.mxu0 0
    %1138 = vmatprep.subr.bf16.mxu0 0
    %1139 = vmatpush2.bf16.msra.mxu0 0
    %1140 = vmatprep.subr.bf16.mxu0 0
    %1141 = vmatpush2.bf16.msra.mxu0 0
    %1142 = vmatprep.mubr.bf16.mxu0 0
    %1143 = vmatmul.mubr.bf16.gmra.mxu0 %v1094
    %v1144 = vpop.f32.mrf.mxu0
    %v1145 = vadd.f32 0.0, %v1144
    %v1146 = vpop.f32.mrf.mxu0
    %v1147 = vpop.f32.mrf.mxu0
    %v1148 = vadd.f32 0.0, %v1147
    %v1149 = vpop.f32.mrf.mxu0
    %1150 = vmatprep.mubr.bf16.mxu0 0
    %1151 = vmatmul.mubr.bf16.gmra.mxu0 %v1095
    %v1152 = vpop.f32.mrf.mxu0
    %v1153 = vadd.f32 0.0, %v1152
    %v1154 = vpop.f32.mrf.mxu0
    %v1155 = vpop.f32.mrf.mxu0
    %v1156 = vadd.f32 0.0, %v1155
    %v1157 = vpop.f32.mrf.mxu0
    %1158 = vmatprep.mubr.bf16.mxu0 0
    %1159 = vmatmul.mubr.bf16.gmra.mxu0 %v1096
    %v1160 = vpop.f32.mrf.mxu0
    %v1161 = vadd.f32 0.0, %v1160
    %v1162 = vpop.f32.mrf.mxu0
    %v1163 = vpop.f32.mrf.mxu0
    %v1164 = vadd.f32 0.0, %v1163
    %v1165 = vpop.f32.mrf.mxu0
    %1166 = vmatprep.mubr.bf16.mxu0 0
    %1167 = vmatmul.mubr.bf16.gmra.mxu0 %v1097
    %v1168 = vpop.f32.mrf.mxu0
    %v1169 = vadd.f32 0.0, %v1168
    %v1170 = vpop.f32.mrf.mxu0
    %v1171 = vpop.f32.mrf.mxu0
    %v1172 = vadd.f32 0.0, %v1171
    %v1173 = vpop.f32.mrf.mxu0
    %1174 = vmatprep.mubr.bf16.mxu0 0
    %1175 = vmatmul.mubr.bf16.gmra.mxu0 %v1098
    %v1176 = vpop.f32.mrf.mxu0
    %v1177 = vadd.f32 0.0, %v1176
    %v1178 = vpop.f32.mrf.mxu0
    %v1179 = vpop.f32.mrf.mxu0
    %v1180 = vadd.f32 0.0, %v1179
    %v1181 = vpop.f32.mrf.mxu0
    %1182 = vmatprep.mubr.bf16.mxu0 0
    %1183 = vmatmul.mubr.bf16.gmra.mxu0 %v1099
    %v1184 = vpop.f32.mrf.mxu0
    %v1185 = vadd.f32 0.0, %v1184
    %v1186 = vpop.f32.mrf.mxu0
    %v1187 = vpop.f32.mrf.mxu0
    %v1188 = vadd.f32 0.0, %v1187
    %v1189 = vpop.f32.mrf.mxu0
    %1190 = vmatprep.mubr.bf16.mxu0 0
    %1191 = vmatmul.mubr.bf16.gmra.mxu0 %v1100
    %v1192 = vpop.f32.mrf.mxu0
    %v1193 = vadd.f32 0.0, %v1192
    %v1194 = vpop.f32.mrf.mxu0
    %v1195 = vpop.f32.mrf.mxu0
    %v1196 = vadd.f32 0.0, %v1195
    %v1197 = vpop.f32.mrf.mxu0
    %1198 = vmatprep.mubr.bf16.mxu0 0
    %1199 = vmatmul.mubr.bf16.gmra.mxu0 %v1101
    %v1200 = vpop.f32.mrf.mxu0
    %v1201 = vadd.f32 0.0, %v1200
    %v1202 = vpop.f32.mrf.mxu0
    %v1203 = vpop.f32.mrf.mxu0
    %v1204 = vadd.f32 0.0, %v1203
    %v1205 = vpop.f32.mrf.mxu0
    %1206 = vdwg.mxu0
    %v1207 = vpack.c.bf16 %v1148, %v1145
    %v1208 = vpack.c.bf16 %v1156, %v1153
    %v1209 = vpack.c.bf16 %v1164, %v1161
    %v1210 = vpack.c.bf16 %v1172, %v1169
    %v1211 = vpack.c.bf16 %v1180, %v1177
    %v1212 = vpack.c.bf16 %v1188, %v1185
    %v1213 = vpack.c.bf16 %v1196, %v1193
    %v1214 = vpack.c.bf16 %v1204, %v1201
    %v1215 = vld [vmem:[#allocation13] sm:$0xf]
    %v1216 = vld [vmem:[#allocation13 + $0x4] sm:$0xf]
    %v1217 = vld [vmem:[#allocation13 + $0x8] sm:$0xf]
    %v1218 = vld [vmem:[#allocation13 + $0xc] sm:$0xf]
    %v1219 = vld [vmem:[#allocation13 + $0x10] sm:$0xf]
    %v1220 = vld [vmem:[#allocation13 + $0x14] sm:$0xf]
    %v1221 = vld [vmem:[#allocation13 + $0x18] sm:$0xf]
    %v1222 = vld [vmem:[#allocation13 + $0x1c] sm:$0xf]
    %v1223 = vld [vmem:[#allocation13 + $0x20] sm:$0xf]
    %v1224 = vld [vmem:[#allocation13 + $0x24] sm:$0xf]
    %v1225 = vld [vmem:[#allocation13 + $0x28] sm:$0xf]
    %v1226 = vld [vmem:[#allocation13 + $0x2c] sm:$0xf]
    %v1227 = vld [vmem:[#allocation13 + $0x30] sm:$0xf]
    %v1228 = vld [vmem:[#allocation13 + $0x34] sm:$0xf]
    %v1229 = vld [vmem:[#allocation13 + $0x38] sm:$0xf]
    %v1230 = vld [vmem:[#allocation13 + $0x3c] sm:$0xf]
    %v1231 = vld [vmem:[#allocation13 + $0x40] sm:$0xf]
    %v1232 = vld [vmem:[#allocation13 + $0x44] sm:$0xf]
    %v1233 = vld [vmem:[#allocation13 + $0x48] sm:$0xf]
    %v1234 = vld [vmem:[#allocation13 + $0x4c] sm:$0xf]
    %v1235 = vld [vmem:[#allocation13 + $0x50] sm:$0xf]
    %v1236 = vld [vmem:[#allocation13 + $0x54] sm:$0xf]
    %v1237 = vld [vmem:[#allocation13 + $0x58] sm:$0xf]
    %v1238 = vld [vmem:[#allocation13 + $0x5c] sm:$0xf]
    %v1239 = vld [vmem:[#allocation13 + $0x60] sm:$0xf]
    %v1240 = vld [vmem:[#allocation13 + $0x64] sm:$0xf]
    %v1241 = vld [vmem:[#allocation13 + $0x68] sm:$0xf]
    %v1242 = vld [vmem:[#allocation13 + $0x6c] sm:$0xf]
    %v1243 = vld [vmem:[#allocation13 + $0x70] sm:$0xf]
    %v1244 = vld [vmem:[#allocation13 + $0x74] sm:$0xf]
    %v1245 = vld [vmem:[#allocation13 + $0x78] sm:$0xf]
    %v1246 = vld [vmem:[#allocation13 + $0x7c] sm:$0xf]
    %v1247 = vld [vmem:[%s9] sm:$0x1]
    %v1249 = vlaneseq
    %v1250 = vshrl.u32 %v1249, 7
    %v1251 = vsub.s32 0, %v1250
    %v1252 = vrot.slane %v1247, %v1251
    %v1286 = vunpack.c.l.b16 %v1215
    %v1287 = vunpack.c.l.b16 %v1216
    %v1288 = vunpack.c.l.b16 %v1217
    %v1289 = vunpack.c.l.b16 %v1218
    %v1290 = vunpack.c.l.b16 %v1219
    %v1291 = vunpack.c.l.b16 %v1220
    %v1292 = vunpack.c.l.b16 %v1221
    %v1293 = vunpack.c.l.b16 %v1222
    %v1294 = vunpack.c.l.b16 %v1223
    %v1295 = vunpack.c.l.b16 %v1224
    %v1296 = vunpack.c.l.b16 %v1225
    %v1297 = vunpack.c.l.b16 %v1226
    %v1298 = vunpack.c.l.b16 %v1227
    %v1299 = vunpack.c.l.b16 %v1228
    %v1300 = vunpack.c.l.b16 %v1229
    %v1301 = vunpack.c.l.b16 %v1230
    %v1302 = vunpack.c.l.b16 %v1231
    %v1303 = vunpack.c.l.b16 %v1232
    %v1304 = vunpack.c.l.b16 %v1233
    %v1305 = vunpack.c.l.b16 %v1234
    %v1306 = vunpack.c.l.b16 %v1235
    %v1307 = vunpack.c.l.b16 %v1236
    %v1308 = vunpack.c.l.b16 %v1237
    %v1309 = vunpack.c.l.b16 %v1238
    %v1310 = vunpack.c.l.b16 %v1239
    %v1311 = vunpack.c.l.b16 %v1240
    %v1312 = vunpack.c.l.b16 %v1241
    %v1313 = vunpack.c.l.b16 %v1242
    %v1314 = vunpack.c.l.b16 %v1243
    %v1315 = vunpack.c.l.b16 %v1244
    %v1316 = vunpack.c.l.b16 %v1245
    %v1317 = vunpack.c.l.b16 %v1246
    %v1318 = vpack.c.b16 %v1287, %v1286
    %v1319 = vpack.c.b16 %v1289, %v1288
    %v1320 = vpack.c.b16 %v1291, %v1290
    %v1321 = vpack.c.b16 %v1293, %v1292
    %v1322 = vpack.c.b16 %v1295, %v1294
    %v1323 = vpack.c.b16 %v1297, %v1296
    %v1324 = vpack.c.b16 %v1299, %v1298
    %v1325 = vpack.c.b16 %v1301, %v1300
    %v1326 = vpack.c.b16 %v1303, %v1302
    %v1327 = vpack.c.b16 %v1305, %v1304
    %v1328 = vpack.c.b16 %v1307, %v1306
    %v1329 = vpack.c.b16 %v1309, %v1308
    %v1330 = vpack.c.b16 %v1311, %v1310
    %v1331 = vpack.c.b16 %v1313, %v1312
    %v1332 = vpack.c.b16 %v1315, %v1314
    %v1333 = vpack.c.b16 %v1317, %v1316
    %1350 = vmatprep.subr.bf16.mxu0 0
    %1351 = vmatpush1.bf16.msra.mxu0 %v1325
    %1352 = vmatprep.subr.bf16.mxu0 0
    %1353 = vmatpush1.bf16.msra.mxu0 %v1324
    %1354 = vmatprep.subr.bf16.mxu0 0
    %1355 = vmatpush1.bf16.msra.mxu0 %v1323
    %1356 = vmatprep.subr.bf16.mxu0 0
    %1357 = vmatpush1.bf16.msra.mxu0 %v1322
    %1358 = vmatprep.subr.bf16.mxu0 0
    %1359 = vmatpush1.bf16.msra.mxu0 %v1321
    %1360 = vmatprep.subr.bf16.mxu0 0
    %1361 = vmatpush1.bf16.msra.mxu0 %v1320
    %1362 = vmatprep.subr.bf16.mxu0 0
    %1363 = vmatpush1.bf16.msra.mxu0 %v1319
    %1364 = vmatprep.subr.bf16.mxu0 0
    %1365 = vmatpush1.bf16.msra.mxu0 %v1318
    %1366 = vmatprep.subr.bf16.mxu0 0
    %1367 = vmatpush2.bf16.msra.mxu0 %v1333
    %1368 = vmatprep.subr.bf16.mxu0 0
    %1369 = vmatpush2.bf16.msra.mxu0 %v1332
    %1370 = vmatprep.subr.bf16.mxu0 0
    %1371 = vmatpush2.bf16.msra.mxu0 %v1331
    %1372 = vmatprep.subr.bf16.mxu0 0
    %1373 = vmatpush2.bf16.msra.mxu0 %v1330
    %1374 = vmatprep.subr.bf16.mxu0 0
    %1375 = vmatpush2.bf16.msra.mxu0 %v1329
    %1376 = vmatprep.subr.bf16.mxu0 0
    %1377 = vmatpush2.bf16.msra.mxu0 %v1328
    %1378 = vmatprep.subr.bf16.mxu0 0
    %1379 = vmatpush2.bf16.msra.mxu0 %v1327
    %1380 = vmatprep.subr.bf16.mxu0 0
    %1381 = vmatpush2.bf16.msra.mxu0 %v1326
    %1382 = vmatprep.mubr.bf16.mxu0 %v1207
    %1383 = vmatmul.mubr.bf16.gmra.mxu0 %v1038
    %v1384 = vpop.f32.mrf.mxu0
    %v1385 = vadd.f32 %v1252, %v1384
    %v1386 = vpop.f32.mrf.mxu0
    %v1387 = vpop.f32.mrf.mxu0
    %v1388 = vadd.f32 %v1252, %v1387
    %v1389 = vpop.f32.mrf.mxu0
    %1390 = vmatprep.mubr.bf16.mxu0 %v1208
    %1391 = vmatmul.mubr.bf16.gmra.mxu0 %v1039
    %v1392 = vpop.f32.mrf.mxu0
    %v1393 = vadd.f32 %v1252, %v1392
    %v1394 = vpop.f32.mrf.mxu0
    %v1395 = vpop.f32.mrf.mxu0
    %v1396 = vadd.f32 %v1252, %v1395
    %v1397 = vpop.f32.mrf.mxu0
    %1398 = vmatprep.mubr.bf16.mxu0 %v1209
    %1399 = vmatmul.mubr.bf16.gmra.mxu0 %v1040
    %v1400 = vpop.f32.mrf.mxu0
    %v1401 = vadd.f32 %v1252, %v1400
    %v1402 = vpop.f32.mrf.mxu0
    %v1403 = vpop.f32.mrf.mxu0
    %v1404 = vadd.f32 %v1252, %v1403
    %v1405 = vpop.f32.mrf.mxu0
    %1406 = vmatprep.mubr.bf16.mxu0 %v1210
    %1407 = vmatmul.mubr.bf16.gmra.mxu0 %v1041
    %v1408 = vpop.f32.mrf.mxu0
    %v1409 = vadd.f32 %v1252, %v1408
    %v1410 = vpop.f32.mrf.mxu0
    %v1411 = vpop.f32.mrf.mxu0
    %v1412 = vadd.f32 %v1252, %v1411
    %v1413 = vpop.f32.mrf.mxu0
    %1414 = vmatprep.mubr.bf16.mxu0 %v1211
    %1415 = vmatmul.mubr.bf16.gmra.mxu0 %v1042
    %v1416 = vpop.f32.mrf.mxu0
    %v1417 = vadd.f32 %v1252, %v1416
    %v1418 = vpop.f32.mrf.mxu0
    %v1419 = vpop.f32.mrf.mxu0
    %v1420 = vadd.f32 %v1252, %v1419
    %v1421 = vpop.f32.mrf.mxu0
    %1422 = vmatprep.mubr.bf16.mxu0 %v1212
    %1423 = vmatmul.mubr.bf16.gmra.mxu0 %v1043
    %v1424 = vpop.f32.mrf.mxu0
    %v1425 = vadd.f32 %v1252, %v1424
    %v1426 = vpop.f32.mrf.mxu0
    %v1427 = vpop.f32.mrf.mxu0
    %v1428 = vadd.f32 %v1252, %v1427
    %v1429 = vpop.f32.mrf.mxu0
    %1430 = vmatprep.mubr.bf16.mxu0 %v1213
    %1431 = vmatmul.mubr.bf16.gmra.mxu0 %v1044
    %v1432 = vpop.f32.mrf.mxu0
    %v1433 = vadd.f32 %v1252, %v1432
    %v1434 = vpop.f32.mrf.mxu0
    %v1435 = vpop.f32.mrf.mxu0
    %v1436 = vadd.f32 %v1252, %v1435
    %v1437 = vpop.f32.mrf.mxu0
    %1438 = vmatprep.mubr.bf16.mxu0 %v1214
    %1439 = vmatmul.mubr.bf16.gmra.mxu0 %v1045
    %v1440 = vpop.f32.mrf.mxu0
    %v1441 = vadd.f32 %v1252, %v1440
    %v1442 = vpop.f32.mrf.mxu0
    %v1443 = vpop.f32.mrf.mxu0
    %v1444 = vadd.f32 %v1252, %v1443
    %v1445 = vpop.f32.mrf.mxu0
    %1446 = vdwg.mxu0
    %1447 = vst [vmem:[#allocation14] sm:$0xff] %v1385
    %1448 = vst [vmem:[#allocation14 + $0x8] sm:$0xff] %v1388
    %1449 = vst [vmem:[#allocation14 + $0x10] sm:$0xff] %v1393
    %1450 = vst [vmem:[#allocation14 + $0x18] sm:$0xff] %v1396
    %1451 = vst [vmem:[#allocation14 + $0x20] sm:$0xff] %v1401
    %1452 = vst [vmem:[#allocation14 + $0x28] sm:$0xff] %v1404
    %1453 = vst [vmem:[#allocation14 + $0x30] sm:$0xff] %v1409
    %1454 = vst [vmem:[#allocation14 + $0x38] sm:$0xff] %v1412
    %1455 = vst [vmem:[#allocation14 + $0x40] sm:$0xff] %v1417
    %1456 = vst [vmem:[#allocation14 + $0x48] sm:$0xff] %v1420
    %1457 = vst [vmem:[#allocation14 + $0x50] sm:$0xff] %v1425
    %1458 = vst [vmem:[#allocation14 + $0x58] sm:$0xff] %v1428
    %1459 = vst [vmem:[#allocation14 + $0x60] sm:$0xff] %v1433
    %1460 = vst [vmem:[#allocation14 + $0x68] sm:$0xff] %v1436
    %1461 = vst [vmem:[#allocation14 + $0x70] sm:$0xff] %v1441
    %1462 = vst [vmem:[#allocation14 + $0x78] sm:$0xff] %v1444
    // Predicated region
    $region70: #{tpu_custom_call.1} parent=1 // pred_check
      _
    $region71: #{tpu_custom_call.1} parent=1 // pred_check_branch
      %1464 = sbr.rel (0) target = $region73
    $region72: #{tpu_custom_call.1} parent=1 // pred_region
      %s1466 = ssub.s32 2048, 2048
      %1467 = vsyncadd [#allocation4], %s1466
      %s1468 = sshll.u32 [#allocation14], 4
      %s1469 = int_to_ptr.vmem [resolvable:$true] %s1468
      %1474 = dma.vmem_to_hbm [thread:$0]  %s1469, 2048, %s10, [#allocation4], 128, 128, 8
    $region73: #{tpu_custom_call.1} parent=1 // pred_fallthru
      _
    // Predicated region
    $region74: #{tpu_custom_call.1} parent=1 // pred_check
      _
    $region75: #{tpu_custom_call.1} parent=1 // pred_check_branch
      %1476 = sbr.rel (0) target = $region77
    $region76: #{tpu_custom_call.1} parent=1 // pred_region
      %1477 = dma.done [#allocation4], 2048
    $region77: #{tpu_custom_call.1} parent=1 // pred_fallthru
      _
    %1478 = vsyncpa [#allocation3], 1
    %1479 = vsyncpa [#allocation6], 1
    %1480 = vsyncpa [#allocation9], 1
    %1481 = vsyncpa [#allocation12], 1
    %1482 = vsyncpa [#allocation4], 1

</llo_original>
